<compile_context>
chip_gen: v6e
topology: v6e:2x2x1
jax: 0.10.0
libtpu: 0.0.40
codegen_flags: <defaults>
</compile_context>

<pallas_src>
import jax
import jax.numpy as jnp
import numpy as np
from jax import lax
from jax.experimental import pallas as pl
from jax.experimental.pallas import tpu as pltpu

INPUT_SIZE = 5
HIDDEN = 10
NUM_LAYERS = 3

LANES = 128                                   # one vreg lane-width (K tile / gate-class tile)
K_H0 = INPUT_SIZE                             # lhs lanes [5, 35) carry [h0 | h1 | h2]
K_BIAS = INPUT_SIZE + NUM_LAYERS * HIDDEN     # lane 35 carries the constant 1.0 (bias row)
N_PACKED = 4 * LANES                          # gate classes i | f | o | g, one 128-lane tile each


def lstm_kernel(x_ref, w_ref, out_ref, hid_ref):
    # x_ref  : (S, B, 128) f32  pre-staged lhs slabs: lanes 0:5 = x_t (0 for tail steps),
    #                           lane 35 = 1.0, rest 0
    # w_ref  : (128, 512)  f32  band-packed weights (+ bias row 35), classes i|f|o|g,
    #                           layer l at lanes 5+l*H : 5+(l+1)*H inside each class tile
    # out_ref: (T, B, 128) f32  per-timestep hidden tile (last-layer h at lanes 25:35)
    # hid_ref: (B, 128)    f32  final hidden tile (h_l at lanes 5+l*H : 5+(l+1)*H)
    S, B, _ = x_ref.shape
    T = out_ref.shape[0]
    H, L, IN = HIDDEN, NUM_LAYERS, INPUT_SIZE

    W = w_ref[...]                                               # hoisted, stays in VMEM/vregs
    lane = lax.broadcasted_iota(jnp.int32, (B, LANES), 1)
    xone_mask = (lane < IN) | (lane == K_BIAS)                   # lanes refreshed from x_slab

    h = jnp.zeros((B, LANES), jnp.float32)                       # h_l at lanes 5+l*H:5+(l+1)*H
    c = jnp.zeros((B, LANES), jnp.float32)

    # Wavefront: at step s, layer l processes timestep t = s - l (if 0 <= t < T).
    for s in range(S):
        lhs = jnp.where(xone_mask, x_ref[s], h)                  # (B, 128) -- single select
        gates = jnp.dot(lhs, W, preferred_element_type=jnp.float32)   # (B, 512), bias folded in

        sig = jax.nn.sigmoid(gates[:, : 3 * LANES])              # i | f | o  (vreg-aligned)
        g_t = jnp.tanh(gates[:, 3 * LANES:])                     # g
        i_t = sig[:, 0:LANES]
        f_t = sig[:, LANES: 2 * LANES]
        o_t = sig[:, 2 * LANES: 3 * LANES]

        c_new = f_t * c + i_t * g_t                              # all aligned, no rotates
        h_new = o_t * jnp.tanh(c_new)

        # Commit only the layers whose timestep is in range (static per unrolled step).
        lo = max(0, s - T + 1)
        hi = min(L - 1, s)
        commit = (lane >= K_H0 + lo * H) & (lane < K_H0 + (hi + 1) * H)
        h = jnp.where(commit, h_new, h)
        c = jnp.where(commit, c_new, c)

        t_top = s - (L - 1)
        if 0 <= t_top < T:
            out_ref[t_top] = h_new                               # lane-dense full-tile store

    hid_ref[...] = h


def pack_params(params):
    """Host-side (numpy) packing into the banded, gate-tiled (128, 512) weight.

    Row (K) layout : 0:5 = x, 5:15 = h0, 15:25 = h1, 25:35 = h2, 35 = bias(1), 36:128 = 0.
    Col (N) layout : class tiles i@[0:128), f@[128:256), o@[256:384), g@[384:512);
                     inside each tile, layer l occupies lanes 5+l*H : 5+(l+1)*H.
    """
    H, IN = HIDDEN, INPUT_SIZE
    W = np.zeros((LANES, N_PACKED), np.float32)
    class_base = {'i': 0, 'f': LANES, 'o': 2 * LANES, 'g': 3 * LANES}
    src_rows = {'i': (0, H), 'f': (H, 2 * H), 'g': (2 * H, 3 * H), 'o': (3 * H, 4 * H)}

    for l, (w_ih, w_hh, b_ih, b_hh) in enumerate(params):
        w_ih = np.asarray(w_ih, np.float32)
        w_hh = np.asarray(w_hh, np.float32)
        b = np.asarray(b_ih, np.float32) + np.asarray(b_hh, np.float32)
        in_rows = slice(0, IN) if l == 0 else slice(K_H0 + (l - 1) * H, K_H0 + l * H)
        rec_rows = slice(K_H0 + l * H, K_H0 + (l + 1) * H)
        for gname in ('i', 'f', 'o', 'g'):
            s0, s1 = src_rows[gname]
            d0 = class_base[gname] + K_H0 + l * H
            W[in_rows, d0:d0 + H] = w_ih[s0:s1, :].T
            W[rec_rows, d0:d0 + H] = w_hh[s0:s1, :].T
            W[K_BIAS, d0:d0 + H] = b[s0:s1]
    return jnp.asarray(W)


def lstm_forward(x, params):
    """x: (B, T, IN) f32 (batch_first, like the PyTorch module).
    Returns (out (B, T, H), hidden (L, B, H)) -- the module's two return values."""
    B, T, _ = x.shape
    L, H = NUM_LAYERS, HIDDEN
    S = T + L - 1

    # Pre-stage x into lhs layout (x at lanes 0:5, constant 1.0 at lane 35).
    x_tm = jnp.transpose(x, (1, 0, 2)).astype(jnp.float32)           # (T, B, IN)
    x_slab = jnp.zeros((S, B, LANES), jnp.float32)
    x_slab = x_slab.at[:T, :, :INPUT_SIZE].set(x_tm)
    x_slab = x_slab.at[:, :, K_BIAS].set(1.0)

    W = pack_params(params)

    out_slab, hid_slab = pl.pallas_call(
        lstm_kernel,
        out_shape=(jax.ShapeDtypeStruct((T, B, LANES), jnp.float32),
                   jax.ShapeDtypeStruct((B, LANES), jnp.float32)),
        in_specs=[pl.BlockSpec(memory_space=pltpu.MemorySpace.VMEM)] * 2,
        out_specs=(pl.BlockSpec(memory_space=pltpu.MemorySpace.VMEM),
                   pl.BlockSpec(memory_space=pltpu.MemorySpace.VMEM)),
    )(x_slab, W)

    top = K_H0 + (L - 1) * H
    out = jnp.transpose(out_slab[:, :, top:top + H], (1, 0, 2))      # (B, T, H)
    hidden = jnp.stack(
        [hid_slab[:, K_H0 + l * H:K_H0 + (l + 1) * H] for l in range(L)], axis=0)
    return out, hidden


def lstm_ref(x, params):
    """Pure-JAX reference with PyTorch nn.LSTM semantics (for verification)."""
    B, T, _ = x.shape
    H = HIDDEN
    layer_in = x
    finals = []
    for (w_ih, w_hh, b_ih, b_hh) in params:
        h = jnp.zeros((B, H), jnp.float32)
        c = jnp.zeros((B, H), jnp.float32)
        outs = []
        for t in range(T):
            gates = layer_in[:, t] @ w_ih.T + b_ih + h @ w_hh.T + b_hh
            i = jax.nn.sigmoid(gates[:, 0:H])
            f = jax.nn.sigmoid(gates[:, H:2 * H])
            g = jnp.tanh(gates[:, 2 * H:3 * H])
            o = jax.nn.sigmoid(gates[:, 3 * H:4 * H])
            c = f * c + i * g
            h = o * jnp.tanh(c)
            outs.append(h)
        layer_in = jnp.stack(outs, axis=1)
        finals.append(h)
    return layer_in, jnp.stack(finals, axis=0)


def init_params(key):
    """Deterministic init matching torch.nn.LSTM shapes: U(-1/sqrt(H), 1/sqrt(H))."""
    k = 1.0 / np.sqrt(HIDDEN)
    params = []
    for l in range(NUM_LAYERS):
        in_l = INPUT_SIZE if l == 0 else HIDDEN
        key, k1, k2, k3, k4 = jax.random.split(key, 5)
        w_ih = jax.random.uniform(k1, (4 * HIDDEN, in_l), jnp.float32, -k, k)
        w_hh = jax.random.uniform(k2, (4 * HIDDEN, HIDDEN), jnp.float32, -k, k)
        b_ih = jax.random.uniform(k3, (4 * HIDDEN,), jnp.float32, -k, k)
        b_hh = jax.random.uniform(k4, (4 * HIDDEN,), jnp.float32, -k, k)
        params.append((w_ih, w_hh, b_ih, b_hh))
    return params


if __name__ == "__main__":
    key = jax.random.PRNGKey(0)
    key, xk = jax.random.split(key)
    B, T = 2, 8     # f32 sublanes allow up to B=8 in the same kernel call for free
    x = jax.random.normal(xk, (B, T, INPUT_SIZE), jnp.float32)
    params = init_params(key)

    out, hidden = lstm_forward(x, params)
    out = jax.block_until_ready(out)
    hidden = jax.block_until_ready(hidden)

    ref_out, ref_hidden = lstm_ref(x, params)

    assert out.shape == (B, T, HIDDEN)
    assert hidden.shape == (NUM_LAYERS, B, HIDDEN)
    np.testing.assert_allclose(np.asarray(out), np.asarray(ref_out), rtol=1e-5, atol=1e-5)
    np.testing.assert_allclose(np.asarray(hidden), np.asarray(ref_hidden), rtol=1e-5, atol=1e-5)

    print("KERNEL_OK")
</pallas_src>

<mosaic_0001>
module attributes {stable_mosaic.version = 11 : i64} {
  func.func @lstm_kernel(%arg0: memref<10x2x128xf32, #tpu.memory_space<vmem>>, %arg1: memref<128x512xf32, #tpu.memory_space<vmem>>, %arg2: memref<8x2x128xf32, #tpu.memory_space<vmem>>, %arg3: memref<2x128xf32, #tpu.memory_space<vmem>>) attributes {dimension_semantics = [], scalar_prefetch = 0 : i64, scratch_operands = 0 : i64, tpu.core_type = #tpu.core_type<tc>} {
    %c0 = arith.constant 0 : index
    %c0_0 = arith.constant 0 : index
    %0 = vector.load %arg1[%c0, %c0_0] : memref<128x512xf32, #tpu.memory_space<vmem>>, vector<128x512xf32>
    %1 = tpu.iota {dimensions = array<i32: 1>} : vector<2x128xi32>
    %c5_i32 = arith.constant 5 : i32
    %2 = vector.broadcast %c5_i32 : i32 to vector<2x128xi32>
    %3 = arith.cmpi slt, %1, %2 : vector<2x128xi32>
    %c35_i32 = arith.constant 35 : i32
    %4 = vector.broadcast %c35_i32 : i32 to vector<2x128xi32>
    %5 = arith.cmpi eq, %1, %4 : vector<2x128xi32>
    %6 = arith.ori %3, %5 : vector<2x128xi1>
    %cst = arith.constant 0.000000e+00 : f32
    %7 = vector.broadcast %cst : f32 to vector<2x128xf32>
    %cst_1 = arith.constant 0.000000e+00 : f32
    %8 = vector.broadcast %cst_1 : f32 to vector<2x128xf32>
    %c0_2 = arith.constant 0 : index
    %c0_3 = arith.constant 0 : index
    %c0_4 = arith.constant 0 : index
    %9 = vector.load %arg0[%c0_2, %c0_3, %c0_4] : memref<10x2x128xf32, #tpu.memory_space<vmem>>, vector<1x2x128xf32>
    %10 = vector.shape_cast %9 : vector<1x2x128xf32> to vector<2x128xf32>
    %11 = arith.select %6, %10, %7 : vector<2x128xi1>, vector<2x128xf32>
    %cst_5 = arith.constant dense<0.000000e+00> : vector<2x512xf32>
    %12 = tpu.matmul %11, %0, %cst_5 {dimension_numbers = #tpu.dot_dimension_numbers<[1], [0], [0], [1], [0, 0, 1, 1], [], []>} : vector<2x128xf32>, vector<128x512xf32>, vector<2x512xf32> -> vector<2x512xf32>
    %13 = vector.extract_strided_slice %12 {offsets = [0, 0], sizes = [2, 384], strides = [1, 1]} : vector<2x512xf32> to vector<2x384xf32>
    %14 = arith.negf %13 : vector<2x384xf32>
    %15 = math.exp %14 : vector<2x384xf32>
    %cst_6 = arith.constant 1.000000e+00 : f32
    %16 = vector.broadcast %cst_6 : f32 to vector<2x384xf32>
    %17 = arith.addf %16, %15 : vector<2x384xf32>
    %18 = arith.divf %16, %17 : vector<2x384xf32>
    %19 = vector.extract_strided_slice %12 {offsets = [0, 384], sizes = [2, 128], strides = [1, 1]} : vector<2x512xf32> to vector<2x128xf32>
    %20 = math.tanh %19 : vector<2x128xf32>
    %21 = vector.extract_strided_slice %18 {offsets = [0, 0], sizes = [2, 128], strides = [1, 1]} : vector<2x384xf32> to vector<2x128xf32>
    %22 = vector.extract_strided_slice %18 {offsets = [0, 128], sizes = [2, 128], strides = [1, 1]} : vector<2x384xf32> to vector<2x128xf32>
    %23 = vector.extract_strided_slice %18 {offsets = [0, 256], sizes = [2, 128], strides = [1, 1]} : vector<2x384xf32> to vector<2x128xf32>
    %24 = arith.mulf %22, %8 : vector<2x128xf32>
    %25 = arith.mulf %21, %20 : vector<2x128xf32>
    %26 = arith.addf %24, %25 : vector<2x128xf32>
    %27 = math.tanh %26 : vector<2x128xf32>
    %28 = arith.mulf %23, %27 : vector<2x128xf32>
    %c5_i32_7 = arith.constant 5 : i32
    %29 = vector.broadcast %c5_i32_7 : i32 to vector<2x128xi32>
    %30 = arith.cmpi sge, %1, %29 : vector<2x128xi32>
    %c15_i32 = arith.constant 15 : i32
    %31 = vector.broadcast %c15_i32 : i32 to vector<2x128xi32>
    %32 = arith.cmpi slt, %1, %31 : vector<2x128xi32>
    %33 = arith.andi %30, %32 : vector<2x128xi1>
    %34 = arith.select %33, %28, %7 : vector<2x128xi1>, vector<2x128xf32>
    %35 = arith.select %33, %26, %8 : vector<2x128xi1>, vector<2x128xf32>
    %c1 = arith.constant 1 : index
    %c0_8 = arith.constant 0 : index
    %c0_9 = arith.constant 0 : index
    %36 = vector.load %arg0[%c1, %c0_8, %c0_9] : memref<10x2x128xf32, #tpu.memory_space<vmem>>, vector<1x2x128xf32>
    %37 = vector.shape_cast %36 : vector<1x2x128xf32> to vector<2x128xf32>
    %38 = arith.select %6, %37, %34 : vector<2x128xi1>, vector<2x128xf32>
    %cst_10 = arith.constant dense<0.000000e+00> : vector<2x512xf32>
    %39 = tpu.matmul %38, %0, %cst_10 {dimension_numbers = #tpu.dot_dimension_numbers<[1], [0], [0], [1], [0, 0, 1, 1], [], []>} : vector<2x128xf32>, vector<128x512xf32>, vector<2x512xf32> -> vector<2x512xf32>
    %40 = vector.extract_strided_slice %39 {offsets = [0, 0], sizes = [2, 384], strides = [1, 1]} : vector<2x512xf32> to vector<2x384xf32>
    %41 = arith.negf %40 : vector<2x384xf32>
    %42 = math.exp %41 : vector<2x384xf32>
    %cst_11 = arith.constant 1.000000e+00 : f32
    %43 = vector.broadcast %cst_11 : f32 to vector<2x384xf32>
    %44 = arith.addf %43, %42 : vector<2x384xf32>
    %45 = arith.divf %43, %44 : vector<2x384xf32>
    %46 = vector.extract_strided_slice %39 {offsets = [0, 384], sizes = [2, 128], strides = [1, 1]} : vector<2x512xf32> to vector<2x128xf32>
    %47 = math.tanh %46 : vector<2x128xf32>
    %48 = vector.extract_strided_slice %45 {offsets = [0, 0], sizes = [2, 128], strides = [1, 1]} : vector<2x384xf32> to vector<2x128xf32>
    %49 = vector.extract_strided_slice %45 {offsets = [0, 128], sizes = [2, 128], strides = [1, 1]} : vector<2x384xf32> to vector<2x128xf32>
    %50 = vector.extract_strided_slice %45 {offsets = [0, 256], sizes = [2, 128], strides = [1, 1]} : vector<2x384xf32> to vector<2x128xf32>
    %51 = arith.mulf %49, %35 : vector<2x128xf32>
    %52 = arith.mulf %48, %47 : vector<2x128xf32>
    %53 = arith.addf %51, %52 : vector<2x128xf32>
    %54 = math.tanh %53 : vector<2x128xf32>
    %55 = arith.mulf %50, %54 : vector<2x128xf32>
    %c5_i32_12 = arith.constant 5 : i32
    %56 = vector.broadcast %c5_i32_12 : i32 to vector<2x128xi32>
    %57 = arith.cmpi sge, %1, %56 : vector<2x128xi32>
    %c25_i32 = arith.constant 25 : i32
    %58 = vector.broadcast %c25_i32 : i32 to vector<2x128xi32>
    %59 = arith.cmpi slt, %1, %58 : vector<2x128xi32>
    %60 = arith.andi %57, %59 : vector<2x128xi1>
    %61 = arith.select %60, %55, %34 : vector<2x128xi1>, vector<2x128xf32>
    %62 = arith.select %60, %53, %35 : vector<2x128xi1>, vector<2x128xf32>
    %c2 = arith.constant 2 : index
    %c0_13 = arith.constant 0 : index
    %c0_14 = arith.constant 0 : index
    %63 = vector.load %arg0[%c2, %c0_13, %c0_14] : memref<10x2x128xf32, #tpu.memory_space<vmem>>, vector<1x2x128xf32>
    %64 = vector.shape_cast %63 : vector<1x2x128xf32> to vector<2x128xf32>
    %65 = arith.select %6, %64, %61 : vector<2x128xi1>, vector<2x128xf32>
    %cst_15 = arith.constant dense<0.000000e+00> : vector<2x512xf32>
    %66 = tpu.matmul %65, %0, %cst_15 {dimension_numbers = #tpu.dot_dimension_numbers<[1], [0], [0], [1], [0, 0, 1, 1], [], []>} : vector<2x128xf32>, vector<128x512xf32>, vector<2x512xf32> -> vector<2x512xf32>
    %67 = vector.extract_strided_slice %66 {offsets = [0, 0], sizes = [2, 384], strides = [1, 1]} : vector<2x512xf32> to vector<2x384xf32>
    %68 = arith.negf %67 : vector<2x384xf32>
    %69 = math.exp %68 : vector<2x384xf32>
    %cst_16 = arith.constant 1.000000e+00 : f32
    %70 = vector.broadcast %cst_16 : f32 to vector<2x384xf32>
    %71 = arith.addf %70, %69 : vector<2x384xf32>
    %72 = arith.divf %70, %71 : vector<2x384xf32>
    %73 = vector.extract_strided_slice %66 {offsets = [0, 384], sizes = [2, 128], strides = [1, 1]} : vector<2x512xf32> to vector<2x128xf32>
    %74 = math.tanh %73 : vector<2x128xf32>
    %75 = vector.extract_strided_slice %72 {offsets = [0, 0], sizes = [2, 128], strides = [1, 1]} : vector<2x384xf32> to vector<2x128xf32>
    %76 = vector.extract_strided_slice %72 {offsets = [0, 128], sizes = [2, 128], strides = [1, 1]} : vector<2x384xf32> to vector<2x128xf32>
    %77 = vector.extract_strided_slice %72 {offsets = [0, 256], sizes = [2, 128], strides = [1, 1]} : vector<2x384xf32> to vector<2x128xf32>
    %78 = arith.mulf %76, %62 : vector<2x128xf32>
    %79 = arith.mulf %75, %74 : vector<2x128xf32>
    %80 = arith.addf %78, %79 : vector<2x128xf32>
    %81 = math.tanh %80 : vector<2x128xf32>
    %82 = arith.mulf %77, %81 : vector<2x128xf32>
    %c5_i32_17 = arith.constant 5 : i32
    %83 = vector.broadcast %c5_i32_17 : i32 to vector<2x128xi32>
    %84 = arith.cmpi sge, %1, %83 : vector<2x128xi32>
    %c35_i32_18 = arith.constant 35 : i32
    %85 = vector.broadcast %c35_i32_18 : i32 to vector<2x128xi32>
    %86 = arith.cmpi slt, %1, %85 : vector<2x128xi32>
    %87 = arith.andi %84, %86 : vector<2x128xi1>
    %88 = arith.select %87, %82, %61 : vector<2x128xi1>, vector<2x128xf32>
    %89 = arith.select %87, %80, %62 : vector<2x128xi1>, vector<2x128xf32>
    %c0_19 = arith.constant 0 : index
    %c0_20 = arith.constant 0 : index
    %c0_21 = arith.constant 0 : index
    %90 = vector.load %arg2[%c0_19, %c0_20, %c0_21] : memref<8x2x128xf32, #tpu.memory_space<vmem>>, vector<1x2x128xf32>
    %91 = vector.shape_cast %90 : vector<1x2x128xf32> to vector<2x128xf32>
    %92 = vector.shape_cast %82 : vector<2x128xf32> to vector<1x2x128xf32>
    tpu.vector_store %arg2[%c0_19, %c0_20, %c0_21], %92 {strides = array<i32>} : memref<8x2x128xf32, #tpu.memory_space<vmem>>, vector<1x2x128xf32>,
    %c3 = arith.constant 3 : index
    %c0_22 = arith.constant 0 : index
    %c0_23 = arith.constant 0 : index
    %93 = vector.load %arg0[%c3, %c0_22, %c0_23] : memref<10x2x128xf32, #tpu.memory_space<vmem>>, vector<1x2x128xf32>
    %94 = vector.shape_cast %93 : vector<1x2x128xf32> to vector<2x128xf32>
    %95 = arith.select %6, %94, %88 : vector<2x128xi1>, vector<2x128xf32>
    %cst_24 = arith.constant dense<0.000000e+00> : vector<2x512xf32>
    %96 = tpu.matmul %95, %0, %cst_24 {dimension_numbers = #tpu.dot_dimension_numbers<[1], [0], [0], [1], [0, 0, 1, 1], [], []>} : vector<2x128xf32>, vector<128x512xf32>, vector<2x512xf32> -> vector<2x512xf32>
    %97 = vector.extract_strided_slice %96 {offsets = [0, 0], sizes = [2, 384], strides = [1, 1]} : vector<2x512xf32> to vector<2x384xf32>
    %98 = arith.negf %97 : vector<2x384xf32>
    %99 = math.exp %98 : vector<2x384xf32>
    %cst_25 = arith.constant 1.000000e+00 : f32
    %100 = vector.broadcast %cst_25 : f32 to vector<2x384xf32>
    %101 = arith.addf %100, %99 : vector<2x384xf32>
    %102 = arith.divf %100, %101 : vector<2x384xf32>
    %103 = vector.extract_strided_slice %96 {offsets = [0, 384], sizes = [2, 128], strides = [1, 1]} : vector<2x512xf32> to vector<2x128xf32>
    %104 = math.tanh %103 : vector<2x128xf32>
    %105 = vector.extract_strided_slice %102 {offsets = [0, 0], sizes = [2, 128], strides = [1, 1]} : vector<2x384xf32> to vector<2x128xf32>
    %106 = vector.extract_strided_slice %102 {offsets = [0, 128], sizes = [2, 128], strides = [1, 1]} : vector<2x384xf32> to vector<2x128xf32>
    %107 = vector.extract_strided_slice %102 {offsets = [0, 256], sizes = [2, 128], strides = [1, 1]} : vector<2x384xf32> to vector<2x128xf32>
    %108 = arith.mulf %106, %89 : vector<2x128xf32>
    %109 = arith.mulf %105, %104 : vector<2x128xf32>
    %110 = arith.addf %108, %109 : vector<2x128xf32>
    %111 = math.tanh %110 : vector<2x128xf32>
    %112 = arith.mulf %107, %111 : vector<2x128xf32>
    %c5_i32_26 = arith.constant 5 : i32
    %113 = vector.broadcast %c5_i32_26 : i32 to vector<2x128xi32>
    %114 = arith.cmpi sge, %1, %113 : vector<2x128xi32>
    %c35_i32_27 = arith.constant 35 : i32
    %115 = vector.broadcast %c35_i32_27 : i32 to vector<2x128xi32>
    %116 = arith.cmpi slt, %1, %115 : vector<2x128xi32>
    %117 = arith.andi %114, %116 : vector<2x128xi1>
    %118 = arith.select %117, %112, %88 : vector<2x128xi1>, vector<2x128xf32>
    %119 = arith.select %117, %110, %89 : vector<2x128xi1>, vector<2x128xf32>
    %c1_28 = arith.constant 1 : index
    %c0_29 = arith.constant 0 : index
    %c0_30 = arith.constant 0 : index
    %120 = vector.load %arg2[%c1_28, %c0_29, %c0_30] : memref<8x2x128xf32, #tpu.memory_space<vmem>>, vector<1x2x128xf32>
    %121 = vector.shape_cast %120 : vector<1x2x128xf32> to vector<2x128xf32>
    %122 = vector.shape_cast %112 : vector<2x128xf32> to vector<1x2x128xf32>
    tpu.vector_store %arg2[%c1_28, %c0_29, %c0_30], %122 {strides = array<i32>} : memref<8x2x128xf32, #tpu.memory_space<vmem>>, vector<1x2x128xf32>,
    %c4 = arith.constant 4 : index
    %c0_31 = arith.constant 0 : index
    %c0_32 = arith.constant 0 : index
    %123 = vector.load %arg0[%c4, %c0_31, %c0_32] : memref<10x2x128xf32, #tpu.memory_space<vmem>>, vector<1x2x128xf32>
    %124 = vector.shape_cast %123 : vector<1x2x128xf32> to vector<2x128xf32>
    %125 = arith.select %6, %124, %118 : vector<2x128xi1>, vector<2x128xf32>
    %cst_33 = arith.constant dense<0.000000e+00> : vector<2x512xf32>
    %126 = tpu.matmul %125, %0, %cst_33 {dimension_numbers = #tpu.dot_dimension_numbers<[1], [0], [0], [1], [0, 0, 1, 1], [], []>} : vector<2x128xf32>, vector<128x512xf32>, vector<2x512xf32> -> vector<2x512xf32>
    %127 = vector.extract_strided_slice %126 {offsets = [0, 0], sizes = [2, 384], strides = [1, 1]} : vector<2x512xf32> to vector<2x384xf32>
    %128 = arith.negf %127 : vector<2x384xf32>
    %129 = math.exp %128 : vector<2x384xf32>
    %cst_34 = arith.constant 1.000000e+00 : f32
    %130 = vector.broadcast %cst_34 : f32 to vector<2x384xf32>
    %131 = arith.addf %130, %129 : vector<2x384xf32>
    %132 = arith.divf %130, %131 : vector<2x384xf32>
    %133 = vector.extract_strided_slice %126 {offsets = [0, 384], sizes = [2, 128], strides = [1, 1]} : vector<2x512xf32> to vector<2x128xf32>
    %134 = math.tanh %133 : vector<2x128xf32>
    %135 = vector.extract_strided_slice %132 {offsets = [0, 0], sizes = [2, 128], strides = [1, 1]} : vector<2x384xf32> to vector<2x128xf32>
    %136 = vector.extract_strided_slice %132 {offsets = [0, 128], sizes = [2, 128], strides = [1, 1]} : vector<2x384xf32> to vector<2x128xf32>
    %137 = vector.extract_strided_slice %132 {offsets = [0, 256], sizes = [2, 128], strides = [1, 1]} : vector<2x384xf32> to vector<2x128xf32>
    %138 = arith.mulf %136, %119 : vector<2x128xf32>
    %139 = arith.mulf %135, %134 : vector<2x128xf32>
    %140 = arith.addf %138, %139 : vector<2x128xf32>
    %141 = math.tanh %140 : vector<2x128xf32>
    %142 = arith.mulf %137, %141 : vector<2x128xf32>
    %c5_i32_35 = arith.constant 5 : i32
    %143 = vector.broadcast %c5_i32_35 : i32 to vector<2x128xi32>
    %144 = arith.cmpi sge, %1, %143 : vector<2x128xi32>
    %c35_i32_36 = arith.constant 35 : i32
    %145 = vector.broadcast %c35_i32_36 : i32 to vector<2x128xi32>
    %146 = arith.cmpi slt, %1, %145 : vector<2x128xi32>
    %147 = arith.andi %144, %146 : vector<2x128xi1>
    %148 = arith.select %147, %142, %118 : vector<2x128xi1>, vector<2x128xf32>
    %149 = arith.select %147, %140, %119 : vector<2x128xi1>, vector<2x128xf32>
    %c2_37 = arith.constant 2 : index
    %c0_38 = arith.constant 0 : index
    %c0_39 = arith.constant 0 : index
    %150 = vector.load %arg2[%c2_37, %c0_38, %c0_39] : memref<8x2x128xf32, #tpu.memory_space<vmem>>, vector<1x2x128xf32>
    %151 = vector.shape_cast %150 : vector<1x2x128xf32> to vector<2x128xf32>
    %152 = vector.shape_cast %142 : vector<2x128xf32> to vector<1x2x128xf32>
    tpu.vector_store %arg2[%c2_37, %c0_38, %c0_39], %152 {strides = array<i32>} : memref<8x2x128xf32, #tpu.memory_space<vmem>>, vector<1x2x128xf32>,
    %c5 = arith.constant 5 : index
    %c0_40 = arith.constant 0 : index
    %c0_41 = arith.constant 0 : index
    %153 = vector.load %arg0[%c5, %c0_40, %c0_41] : memref<10x2x128xf32, #tpu.memory_space<vmem>>, vector<1x2x128xf32>
    %154 = vector.shape_cast %153 : vector<1x2x128xf32> to vector<2x128xf32>
    %155 = arith.select %6, %154, %148 : vector<2x128xi1>, vector<2x128xf32>
    %cst_42 = arith.constant dense<0.000000e+00> : vector<2x512xf32>
    %156 = tpu.matmul %155, %0, %cst_42 {dimension_numbers = #tpu.dot_dimension_numbers<[1], [0], [0], [1], [0, 0, 1, 1], [], []>} : vector<2x128xf32>, vector<128x512xf32>, vector<2x512xf32> -> vector<2x512xf32>
    %157 = vector.extract_strided_slice %156 {offsets = [0, 0], sizes = [2, 384], strides = [1, 1]} : vector<2x512xf32> to vector<2x384xf32>
    %158 = arith.negf %157 : vector<2x384xf32>
    %159 = math.exp %158 : vector<2x384xf32>
    %cst_43 = arith.constant 1.000000e+00 : f32
    %160 = vector.broadcast %cst_43 : f32 to vector<2x384xf32>
    %161 = arith.addf %160, %159 : vector<2x384xf32>
    %162 = arith.divf %160, %161 : vector<2x384xf32>
    %163 = vector.extract_strided_slice %156 {offsets = [0, 384], sizes = [2, 128], strides = [1, 1]} : vector<2x512xf32> to vector<2x128xf32>
    %164 = math.tanh %163 : vector<2x128xf32>
    %165 = vector.extract_strided_slice %162 {offsets = [0, 0], sizes = [2, 128], strides = [1, 1]} : vector<2x384xf32> to vector<2x128xf32>
    %166 = vector.extract_strided_slice %162 {offsets = [0, 128], sizes = [2, 128], strides = [1, 1]} : vector<2x384xf32> to vector<2x128xf32>
    %167 = vector.extract_strided_slice %162 {offsets = [0, 256], sizes = [2, 128], strides = [1, 1]} : vector<2x384xf32> to vector<2x128xf32>
    %168 = arith.mulf %166, %149 : vector<2x128xf32>
    %169 = arith.mulf %165, %164 : vector<2x128xf32>
    %170 = arith.addf %168, %169 : vector<2x128xf32>
    %171 = math.tanh %170 : vector<2x128xf32>
    %172 = arith.mulf %167, %171 : vector<2x128xf32>
    %c5_i32_44 = arith.constant 5 : i32
    %173 = vector.broadcast %c5_i32_44 : i32 to vector<2x128xi32>
    %174 = arith.cmpi sge, %1, %173 : vector<2x128xi32>
    %c35_i32_45 = arith.constant 35 : i32
    %175 = vector.broadcast %c35_i32_45 : i32 to vector<2x128xi32>
    %176 = arith.cmpi slt, %1, %175 : vector<2x128xi32>
    %177 = arith.andi %174, %176 : vector<2x128xi1>
    %178 = arith.select %177, %172, %148 : vector<2x128xi1>, vector<2x128xf32>
    %179 = arith.select %177, %170, %149 : vector<2x128xi1>, vector<2x128xf32>
    %c3_46 = arith.constant 3 : index
    %c0_47 = arith.constant 0 : index
    %c0_48 = arith.constant 0 : index
    %180 = vector.load %arg2[%c3_46, %c0_47, %c0_48] : memref<8x2x128xf32, #tpu.memory_space<vmem>>, vector<1x2x128xf32>
    %181 = vector.shape_cast %180 : vector<1x2x128xf32> to vector<2x128xf32>
    %182 = vector.shape_cast %172 : vector<2x128xf32> to vector<1x2x128xf32>
    tpu.vector_store %arg2[%c3_46, %c0_47, %c0_48], %182 {strides = array<i32>} : memref<8x2x128xf32, #tpu.memory_space<vmem>>, vector<1x2x128xf32>,
    %c6 = arith.constant 6 : index
    %c0_49 = arith.constant 0 : index
    %c0_50 = arith.constant 0 : index
    %183 = vector.load %arg0[%c6, %c0_49, %c0_50] : memref<10x2x128xf32, #tpu.memory_space<vmem>>, vector<1x2x128xf32>
    %184 = vector.shape_cast %183 : vector<1x2x128xf32> to vector<2x128xf32>
    %185 = arith.select %6, %184, %178 : vector<2x128xi1>, vector<2x128xf32>
    %cst_51 = arith.constant dense<0.000000e+00> : vector<2x512xf32>
    %186 = tpu.matmul %185, %0, %cst_51 {dimension_numbers = #tpu.dot_dimension_numbers<[1], [0], [0], [1], [0, 0, 1, 1], [], []>} : vector<2x128xf32>, vector<128x512xf32>, vector<2x512xf32> -> vector<2x512xf32>
    %187 = vector.extract_strided_slice %186 {offsets = [0, 0], sizes = [2, 384], strides = [1, 1]} : vector<2x512xf32> to vector<2x384xf32>
    %188 = arith.negf %187 : vector<2x384xf32>
    %189 = math.exp %188 : vector<2x384xf32>
    %cst_52 = arith.constant 1.000000e+00 : f32
    %190 = vector.broadcast %cst_52 : f32 to vector<2x384xf32>
    %191 = arith.addf %190, %189 : vector<2x384xf32>
    %192 = arith.divf %190, %191 : vector<2x384xf32>
    %193 = vector.extract_strided_slice %186 {offsets = [0, 384], sizes = [2, 128], strides = [1, 1]} : vector<2x512xf32> to vector<2x128xf32>
    %194 = math.tanh %193 : vector<2x128xf32>
    %195 = vector.extract_strided_slice %192 {offsets = [0, 0], sizes = [2, 128], strides = [1, 1]} : vector<2x384xf32> to vector<2x128xf32>
    %196 = vector.extract_strided_slice %192 {offsets = [0, 128], sizes = [2, 128], strides = [1, 1]} : vector<2x384xf32> to vector<2x128xf32>
    %197 = vector.extract_strided_slice %192 {offsets = [0, 256], sizes = [2, 128], strides = [1, 1]} : vector<2x384xf32> to vector<2x128xf32>
    %198 = arith.mulf %196, %179 : vector<2x128xf32>
    %199 = arith.mulf %195, %194 : vector<2x128xf32>
    %200 = arith.addf %198, %199 : vector<2x128xf32>
    %201 = math.tanh %200 : vector<2x128xf32>
    %202 = arith.mulf %197, %201 : vector<2x128xf32>
    %c5_i32_53 = arith.constant 5 : i32
    %203 = vector.broadcast %c5_i32_53 : i32 to vector<2x128xi32>
    %204 = arith.cmpi sge, %1, %203 : vector<2x128xi32>
    %c35_i32_54 = arith.constant 35 : i32
    %205 = vector.broadcast %c35_i32_54 : i32 to vector<2x128xi32>
    %206 = arith.cmpi slt, %1, %205 : vector<2x128xi32>
    %207 = arith.andi %204, %206 : vector<2x128xi1>
    %208 = arith.select %207, %202, %178 : vector<2x128xi1>, vector<2x128xf32>
    %209 = arith.select %207, %200, %179 : vector<2x128xi1>, vector<2x128xf32>
    %c4_55 = arith.constant 4 : index
    %c0_56 = arith.constant 0 : index
    %c0_57 = arith.constant 0 : index
    %210 = vector.load %arg2[%c4_55, %c0_56, %c0_57] : memref<8x2x128xf32, #tpu.memory_space<vmem>>, vector<1x2x128xf32>
    %211 = vector.shape_cast %210 : vector<1x2x128xf32> to vector<2x128xf32>
    %212 = vector.shape_cast %202 : vector<2x128xf32> to vector<1x2x128xf32>
    tpu.vector_store %arg2[%c4_55, %c0_56, %c0_57], %212 {strides = array<i32>} : memref<8x2x128xf32, #tpu.memory_space<vmem>>, vector<1x2x128xf32>,
    %c7 = arith.constant 7 : index
    %c0_58 = arith.constant 0 : index
    %c0_59 = arith.constant 0 : index
    %213 = vector.load %arg0[%c7, %c0_58, %c0_59] : memref<10x2x128xf32, #tpu.memory_space<vmem>>, vector<1x2x128xf32>
    %214 = vector.shape_cast %213 : vector<1x2x128xf32> to vector<2x128xf32>
    %215 = arith.select %6, %214, %208 : vector<2x128xi1>, vector<2x128xf32>
    %cst_60 = arith.constant dense<0.000000e+00> : vector<2x512xf32>
    %216 = tpu.matmul %215, %0, %cst_60 {dimension_numbers = #tpu.dot_dimension_numbers<[1], [0], [0], [1], [0, 0, 1, 1], [], []>} : vector<2x128xf32>, vector<128x512xf32>, vector<2x512xf32> -> vector<2x512xf32>
    %217 = vector.extract_strided_slice %216 {offsets = [0, 0], sizes = [2, 384], strides = [1, 1]} : vector<2x512xf32> to vector<2x384xf32>
    %218 = arith.negf %217 : vector<2x384xf32>
    %219 = math.exp %218 : vector<2x384xf32>
    %cst_61 = arith.constant 1.000000e+00 : f32
    %220 = vector.broadcast %cst_61 : f32 to vector<2x384xf32>
    %221 = arith.addf %220, %219 : vector<2x384xf32>
    %222 = arith.divf %220, %221 : vector<2x384xf32>
    %223 = vector.extract_strided_slice %216 {offsets = [0, 384], sizes = [2, 128], strides = [1, 1]} : vector<2x512xf32> to vector<2x128xf32>
    %224 = math.tanh %223 : vector<2x128xf32>
    %225 = vector.extract_strided_slice %222 {offsets = [0, 0], sizes = [2, 128], strides = [1, 1]} : vector<2x384xf32> to vector<2x128xf32>
    %226 = vector.extract_strided_slice %222 {offsets = [0, 128], sizes = [2, 128], strides = [1, 1]} : vector<2x384xf32> to vector<2x128xf32>
    %227 = vector.extract_strided_slice %222 {offsets = [0, 256], sizes = [2, 128], strides = [1, 1]} : vector<2x384xf32> to vector<2x128xf32>
    %228 = arith.mulf %226, %209 : vector<2x128xf32>
    %229 = arith.mulf %225, %224 : vector<2x128xf32>
    %230 = arith.addf %228, %229 : vector<2x128xf32>
    %231 = math.tanh %230 : vector<2x128xf32>
    %232 = arith.mulf %227, %231 : vector<2x128xf32>
    %c5_i32_62 = arith.constant 5 : i32
    %233 = vector.broadcast %c5_i32_62 : i32 to vector<2x128xi32>
    %234 = arith.cmpi sge, %1, %233 : vector<2x128xi32>
    %c35_i32_63 = arith.constant 35 : i32
    %235 = vector.broadcast %c35_i32_63 : i32 to vector<2x128xi32>
    %236 = arith.cmpi slt, %1, %235 : vector<2x128xi32>
    %237 = arith.andi %234, %236 : vector<2x128xi1>
    %238 = arith.select %237, %232, %208 : vector<2x128xi1>, vector<2x128xf32>
    %239 = arith.select %237, %230, %209 : vector<2x128xi1>, vector<2x128xf32>
    %c5_64 = arith.constant 5 : index
    %c0_65 = arith.constant 0 : index
    %c0_66 = arith.constant 0 : index
    %240 = vector.load %arg2[%c5_64, %c0_65, %c0_66] : memref<8x2x128xf32, #tpu.memory_space<vmem>>, vector<1x2x128xf32>
    %241 = vector.shape_cast %240 : vector<1x2x128xf32> to vector<2x128xf32>
    %242 = vector.shape_cast %232 : vector<2x128xf32> to vector<1x2x128xf32>
    tpu.vector_store %arg2[%c5_64, %c0_65, %c0_66], %242 {strides = array<i32>} : memref<8x2x128xf32, #tpu.memory_space<vmem>>, vector<1x2x128xf32>,
    %c8 = arith.constant 8 : index
    %c0_67 = arith.constant 0 : index
    %c0_68 = arith.constant 0 : index
    %243 = vector.load %arg0[%c8, %c0_67, %c0_68] : memref<10x2x128xf32, #tpu.memory_space<vmem>>, vector<1x2x128xf32>
    %244 = vector.shape_cast %243 : vector<1x2x128xf32> to vector<2x128xf32>
    %245 = arith.select %6, %244, %238 : vector<2x128xi1>, vector<2x128xf32>
    %cst_69 = arith.constant dense<0.000000e+00> : vector<2x512xf32>
    %246 = tpu.matmul %245, %0, %cst_69 {dimension_numbers = #tpu.dot_dimension_numbers<[1], [0], [0], [1], [0, 0, 1, 1], [], []>} : vector<2x128xf32>, vector<128x512xf32>, vector<2x512xf32> -> vector<2x512xf32>
    %247 = vector.extract_strided_slice %246 {offsets = [0, 0], sizes = [2, 384], strides = [1, 1]} : vector<2x512xf32> to vector<2x384xf32>
    %248 = arith.negf %247 : vector<2x384xf32>
    %249 = math.exp %248 : vector<2x384xf32>
    %cst_70 = arith.constant 1.000000e+00 : f32
    %250 = vector.broadcast %cst_70 : f32 to vector<2x384xf32>
    %251 = arith.addf %250, %249 : vector<2x384xf32>
    %252 = arith.divf %250, %251 : vector<2x384xf32>
    %253 = vector.extract_strided_slice %246 {offsets = [0, 384], sizes = [2, 128], strides = [1, 1]} : vector<2x512xf32> to vector<2x128xf32>
    %254 = math.tanh %253 : vector<2x128xf32>
    %255 = vector.extract_strided_slice %252 {offsets = [0, 0], sizes = [2, 128], strides = [1, 1]} : vector<2x384xf32> to vector<2x128xf32>
    %256 = vector.extract_strided_slice %252 {offsets = [0, 128], sizes = [2, 128], strides = [1, 1]} : vector<2x384xf32> to vector<2x128xf32>
    %257 = vector.extract_strided_slice %252 {offsets = [0, 256], sizes = [2, 128], strides = [1, 1]} : vector<2x384xf32> to vector<2x128xf32>
    %258 = arith.mulf %256, %239 : vector<2x128xf32>
    %259 = arith.mulf %255, %254 : vector<2x128xf32>
    %260 = arith.addf %258, %259 : vector<2x128xf32>
    %261 = math.tanh %260 : vector<2x128xf32>
    %262 = arith.mulf %257, %261 : vector<2x128xf32>
    %c15_i32_71 = arith.constant 15 : i32
    %263 = vector.broadcast %c15_i32_71 : i32 to vector<2x128xi32>
    %264 = arith.cmpi sge, %1, %263 : vector<2x128xi32>
    %c35_i32_72 = arith.constant 35 : i32
    %265 = vector.broadcast %c35_i32_72 : i32 to vector<2x128xi32>
    %266 = arith.cmpi slt, %1, %265 : vector<2x128xi32>
    %267 = arith.andi %264, %266 : vector<2x128xi1>
    %268 = arith.select %267, %262, %238 : vector<2x128xi1>, vector<2x128xf32>
    %269 = arith.select %267, %260, %239 : vector<2x128xi1>, vector<2x128xf32>
    %c6_73 = arith.constant 6 : index
    %c0_74 = arith.constant 0 : index
    %c0_75 = arith.constant 0 : index
    %270 = vector.load %arg2[%c6_73, %c0_74, %c0_75] : memref<8x2x128xf32, #tpu.memory_space<vmem>>, vector<1x2x128xf32>
    %271 = vector.shape_cast %270 : vector<1x2x128xf32> to vector<2x128xf32>
    %272 = vector.shape_cast %262 : vector<2x128xf32> to vector<1x2x128xf32>
    tpu.vector_store %arg2[%c6_73, %c0_74, %c0_75], %272 {strides = array<i32>} : memref<8x2x128xf32, #tpu.memory_space<vmem>>, vector<1x2x128xf32>,
    %c9 = arith.constant 9 : index
    %c0_76 = arith.constant 0 : index
    %c0_77 = arith.constant 0 : index
    %273 = vector.load %arg0[%c9, %c0_76, %c0_77] : memref<10x2x128xf32, #tpu.memory_space<vmem>>, vector<1x2x128xf32>
    %274 = vector.shape_cast %273 : vector<1x2x128xf32> to vector<2x128xf32>
    %275 = arith.select %6, %274, %268 : vector<2x128xi1>, vector<2x128xf32>
    %cst_78 = arith.constant dense<0.000000e+00> : vector<2x512xf32>
    %276 = tpu.matmul %275, %0, %cst_78 {dimension_numbers = #tpu.dot_dimension_numbers<[1], [0], [0], [1], [0, 0, 1, 1], [], []>} : vector<2x128xf32>, vector<128x512xf32>, vector<2x512xf32> -> vector<2x512xf32>
    %277 = vector.extract_strided_slice %276 {offsets = [0, 0], sizes = [2, 384], strides = [1, 1]} : vector<2x512xf32> to vector<2x384xf32>
    %278 = arith.negf %277 : vector<2x384xf32>
    %279 = math.exp %278 : vector<2x384xf32>
    %cst_79 = arith.constant 1.000000e+00 : f32
    %280 = vector.broadcast %cst_79 : f32 to vector<2x384xf32>
    %281 = arith.addf %280, %279 : vector<2x384xf32>
    %282 = arith.divf %280, %281 : vector<2x384xf32>
    %283 = vector.extract_strided_slice %276 {offsets = [0, 384], sizes = [2, 128], strides = [1, 1]} : vector<2x512xf32> to vector<2x128xf32>
    %284 = math.tanh %283 : vector<2x128xf32>
    %285 = vector.extract_strided_slice %282 {offsets = [0, 0], sizes = [2, 128], strides = [1, 1]} : vector<2x384xf32> to vector<2x128xf32>
    %286 = vector.extract_strided_slice %282 {offsets = [0, 128], sizes = [2, 128], strides = [1, 1]} : vector<2x384xf32> to vector<2x128xf32>
    %287 = vector.extract_strided_slice %282 {offsets = [0, 256], sizes = [2, 128], strides = [1, 1]} : vector<2x384xf32> to vector<2x128xf32>
    %288 = arith.mulf %286, %269 : vector<2x128xf32>
    %289 = arith.mulf %285, %284 : vector<2x128xf32>
    %290 = arith.addf %288, %289 : vector<2x128xf32>
    %291 = math.tanh %290 : vector<2x128xf32>
    %292 = arith.mulf %287, %291 : vector<2x128xf32>
    %c25_i32_80 = arith.constant 25 : i32
    %293 = vector.broadcast %c25_i32_80 : i32 to vector<2x128xi32>
    %294 = arith.cmpi sge, %1, %293 : vector<2x128xi32>
    %c35_i32_81 = arith.constant 35 : i32
    %295 = vector.broadcast %c35_i32_81 : i32 to vector<2x128xi32>
    %296 = arith.cmpi slt, %1, %295 : vector<2x128xi32>
    %297 = arith.andi %294, %296 : vector<2x128xi1>
    %298 = arith.select %297, %292, %268 : vector<2x128xi1>, vector<2x128xf32>
    %c7_82 = arith.constant 7 : index
    %c0_83 = arith.constant 0 : index
    %c0_84 = arith.constant 0 : index
    %299 = vector.load %arg2[%c7_82, %c0_83, %c0_84] : memref<8x2x128xf32, #tpu.memory_space<vmem>>, vector<1x2x128xf32>
    %300 = vector.shape_cast %299 : vector<1x2x128xf32> to vector<2x128xf32>
    %301 = vector.shape_cast %292 : vector<2x128xf32> to vector<1x2x128xf32>
    tpu.vector_store %arg2[%c7_82, %c0_83, %c0_84], %301 {strides = array<i32>} : memref<8x2x128xf32, #tpu.memory_space<vmem>>, vector<1x2x128xf32>,
    %c0_85 = arith.constant 0 : index
    %c0_86 = arith.constant 0 : index
    %302 = vector.load %arg3[%c0_85, %c0_86] : memref<2x128xf32, #tpu.memory_space<vmem>>, vector<2x128xf32>
    tpu.vector_store %arg3[%c0_85, %c0_86], %298 {strides = array<i32>} : memref<2x128xf32, #tpu.memory_space<vmem>>, vector<2x128xf32>,
    return
  }
}

</mosaic_0001>

<llo_original>
// kernel: tpu_custom_call.1
$region0: #{tpu_custom_call.1}
  #allocation0 [shape = 'u32[]', space=smem, size = 0x4, offset = 0x4, fixed_abs, tag = 'smem constant byte address 0x4 - core index']
  #allocation1 [shape = 'u32[144,128]{1,0:T(1,128)}', space=vmem, size = 0x12000, scoped, tag = 'internal scratch']
  %s0 = inlined_call_operand.hbm [shape: f32[10,2,128], index: 0, kind: input, shape index: {}]
  %s1 = inlined_call_operand.hbm [shape: f32[128,512], index: 1, kind: input, shape index: {}]
  %s2 = inlined_call_operand.hbm [shape: f32[8,2,128], index: 2, kind: output, shape index: {0}]
  %s3 = inlined_call_operand.hbm [shape: f32[2,128], index: 3, kind: output, shape index: {1}]
  %4 = xla_tuple %s2, %s3
  %s5 = sld [smem:[#allocation0]]
  $region34: #{tpu_custom_call.1} parent=0
    _
  %s7 = ssub.s32 1, %s5
  %s8 = scalar_select 0, %s7, %s5
  $region1: #{tpu_custom_call.1} parent=0
    #allocation2 [shape = 'u8[10240]{0}', space=vmem, size = 0x2800, scoped, tag = 'input window, operand 0, single buffered']
    #allocation3 [shape = 's32[1]{0}', space=sflag, size = 0x4, scoped, tag = 'scoped memory for tpu_custom_call.1']
    #allocation4 [shape = 's32[1]{0}', space=sflag, size = 0x4, scoped, tag = 'scoped memory for tpu_custom_call.1']
    #allocation5 [shape = 'u8[262144]{0}', space=vmem, size = 0x40000, scoped, tag = 'input window, operand 1, single buffered']
    #allocation6 [shape = 's32[1]{0}', space=sflag, size = 0x4, scoped, tag = 'scoped memory for tpu_custom_call.1']
    #allocation7 [shape = 'u8[8192]{0}', space=vmem, size = 0x2000, scoped, tag = 'output window, operand 0, single buffered']
    #allocation8 [shape = 'u8[1024]{0}', space=vmem, size = 0x400, scoped, tag = 'output window, operand 1, single buffered']
    #allocation9 [shape = 's32[1]{0}', space=sflag, size = 0x4, scoped, tag = 'scoped memory for tpu_custom_call.1']
    %9 = vsyncpa [#allocation3], 0
    %10 = vsyncpa [#allocation6], 0
    %11 = vsyncpa [#allocation4], 0
    %12 = vsyncpa [#allocation9], 0
    // Predicated region
    $region2: #{tpu_custom_call.1} parent=1 // pred_check
      _
    $region3: #{tpu_custom_call.1} parent=1 // pred_check_branch
      %14 = sbr.rel (0) target = $region5
    $region4: #{tpu_custom_call.1} parent=1 // pred_region
      %s16 = ssub.s32 320, 320
      %17 = vsyncadd [#allocation3], %s16
      %s18 = sshll.u32 [#allocation2], 4
      %s19 = int_to_ptr.vmem [resolvable:$true] %s18
      %24 = dma.hbm_to_vmem [thread:$0]  %s0, 320, %s19, [#allocation3], 32, 32, 2
    $region5: #{tpu_custom_call.1} parent=1 // pred_fallthru
      _
    // Predicated region
    $region6: #{tpu_custom_call.1} parent=1 // pred_check
      _
    $region7: #{tpu_custom_call.1} parent=1 // pred_check_branch
      %26 = sbr.rel (0) target = $region9
    $region8: #{tpu_custom_call.1} parent=1 // pred_region
      %s28 = ssub.s32 8192, 8192
      %29 = vsyncadd [#allocation6], %s28
      %s30 = sshll.u32 [#allocation5], 4
      %s31 = int_to_ptr.vmem [resolvable:$true] %s30
      %36 = dma.hbm_to_vmem [thread:$0]  %s1, 8192, %s31, [#allocation6], 512, 512, 32
    $region9: #{tpu_custom_call.1} parent=1 // pred_fallthru
      _
    // Predicated region
    $region10: #{tpu_custom_call.1} parent=1 // pred_check
      _
    $region11: #{tpu_custom_call.1} parent=1 // pred_check_branch
      %38 = sbr.rel (0) target = $region13
    $region12: #{tpu_custom_call.1} parent=1 // pred_region
      %39 = dma.done [#allocation3], 320
    $region13: #{tpu_custom_call.1} parent=1 // pred_fallthru
      _
    // Predicated region
    $region14: #{tpu_custom_call.1} parent=1 // pred_check
      _
    $region15: #{tpu_custom_call.1} parent=1 // pred_check_branch
      %41 = sbr.rel (0) target = $region17
    $region16: #{tpu_custom_call.1} parent=1 // pred_region
      %42 = dma.done [#allocation6], 8192
    $region17: #{tpu_custom_call.1} parent=1 // pred_fallthru
      _
    %v43 = vld [vmem:[#allocation5] sm:$0xff]
    %v44 = vld [vmem:[#allocation5 + $0x8] sm:$0xff]
    %v45 = vld [vmem:[#allocation5 + $0x10] sm:$0xff]
    %v46 = vld [vmem:[#allocation5 + $0x18] sm:$0xff]
    %v47 = vld [vmem:[#allocation5 + $0x20] sm:$0xff]
    %v48 = vld [vmem:[#allocation5 + $0x28] sm:$0xff]
    %v49 = vld [vmem:[#allocation5 + $0x30] sm:$0xff]
    %v50 = vld [vmem:[#allocation5 + $0x38] sm:$0xff]
    %v51 = vld [vmem:[#allocation5 + $0x40] sm:$0xff]
    %v52 = vld [vmem:[#allocation5 + $0x48] sm:$0xff]
    %v53 = vld [vmem:[#allocation5 + $0x50] sm:$0xff]
    %v54 = vld [vmem:[#allocation5 + $0x58] sm:$0xff]
    %v55 = vld [vmem:[#allocation5 + $0x60] sm:$0xff]
    %v56 = vld [vmem:[#allocation5 + $0x68] sm:$0xff]
    %v57 = vld [vmem:[#allocation5 + $0x70] sm:$0xff]
    %v58 = vld [vmem:[#allocation5 + $0x78] sm:$0xff]
    %v59 = vld [vmem:[#allocation5 + $0x80] sm:$0xff]
    %v60 = vld [vmem:[#allocation5 + $0x88] sm:$0xff]
    %v61 = vld [vmem:[#allocation5 + $0x90] sm:$0xff]
    %v62 = vld [vmem:[#allocation5 + $0x98] sm:$0xff]
    %v63 = vld [vmem:[#allocation5 + $0xa0] sm:$0xff]
    %v64 = vld [vmem:[#allocation5 + $0xa8] sm:$0xff]
    %v65 = vld [vmem:[#allocation5 + $0xb0] sm:$0xff]
    %v66 = vld [vmem:[#allocation5 + $0xb8] sm:$0xff]
    %v67 = vld [vmem:[#allocation5 + $0xc0] sm:$0xff]
    %v68 = vld [vmem:[#allocation5 + $0xc8] sm:$0xff]
    %v69 = vld [vmem:[#allocation5 + $0xd0] sm:$0xff]
    %v70 = vld [vmem:[#allocation5 + $0xd8] sm:$0xff]
    %v71 = vld [vmem:[#allocation5 + $0xe0] sm:$0xff]
    %v72 = vld [vmem:[#allocation5 + $0xe8] sm:$0xff]
    %v73 = vld [vmem:[#allocation5 + $0xf0] sm:$0xff]
    %v74 = vld [vmem:[#allocation5 + $0xf8] sm:$0xff]
    %v75 = vld [vmem:[#allocation5 + $0x100] sm:$0xff]
    %v76 = vld [vmem:[#allocation5 + $0x108] sm:$0xff]
    %v77 = vld [vmem:[#allocation5 + $0x110] sm:$0xff]
    %v78 = vld [vmem:[#allocation5 + $0x118] sm:$0xff]
    %v79 = vld [vmem:[#allocation5 + $0x120] sm:$0xff]
    %v80 = vld [vmem:[#allocation5 + $0x128] sm:$0xff]
    %v81 = vld [vmem:[#allocation5 + $0x130] sm:$0xff]
    %v82 = vld [vmem:[#allocation5 + $0x138] sm:$0xff]
    %v83 = vld [vmem:[#allocation5 + $0x140] sm:$0xff]
    %v84 = vld [vmem:[#allocation5 + $0x148] sm:$0xff]
    %v85 = vld [vmem:[#allocation5 + $0x150] sm:$0xff]
    %v86 = vld [vmem:[#allocation5 + $0x158] sm:$0xff]
    %v87 = vld [vmem:[#allocation5 + $0x160] sm:$0xff]
    %v88 = vld [vmem:[#allocation5 + $0x168] sm:$0xff]
    %v89 = vld [vmem:[#allocation5 + $0x170] sm:$0xff]
    %v90 = vld [vmem:[#allocation5 + $0x178] sm:$0xff]
    %v91 = vld [vmem:[#allocation5 + $0x180] sm:$0xff]
    %v92 = vld [vmem:[#allocation5 + $0x188] sm:$0xff]
    %v93 = vld [vmem:[#allocation5 + $0x190] sm:$0xff]
    %v94 = vld [vmem:[#allocation5 + $0x198] sm:$0xff]
    %v95 = vld [vmem:[#allocation5 + $0x1a0] sm:$0xff]
    %v96 = vld [vmem:[#allocation5 + $0x1a8] sm:$0xff]
    %v97 = vld [vmem:[#allocation5 + $0x1b0] sm:$0xff]
    %v98 = vld [vmem:[#allocation5 + $0x1b8] sm:$0xff]
    %v99 = vld [vmem:[#allocation5 + $0x1c0] sm:$0xff]
    %v100 = vld [vmem:[#allocation5 + $0x1c8] sm:$0xff]
    %v101 = vld [vmem:[#allocation5 + $0x1d0] sm:$0xff]
    %v102 = vld [vmem:[#allocation5 + $0x1d8] sm:$0xff]
    %v103 = vld [vmem:[#allocation5 + $0x1e0] sm:$0xff]
    %v104 = vld [vmem:[#allocation5 + $0x1e8] sm:$0xff]
    %v105 = vld [vmem:[#allocation5 + $0x1f0] sm:$0xff]
    %v106 = vld [vmem:[#allocation5 + $0x1f8] sm:$0xff]
    %v107 = vlaneseq
    %v108 = vand.u32 %v107, 127
    %vm109 = vcmp.lt.s32.totalorder %v108, 5
    %vm110 = vcmp.eq.s32.totalorder %v108, 35
    %vm111 = vmor %vm109, %vm110
    %v112 = vld [vmem:[#allocation2] sm:$0x3]
    %v113 = vsel %vm111, %v112, 0.0
    %114 = vmatprep.subr.mxu0 %v104
    %115 = vmatpush1.msra.mxu0 %v103
    %116 = vmatprep.subr.mxu0 %v100
    %117 = vmatpush1.msra.mxu0 %v99
    %118 = vmatprep.subr.mxu0 %v96
    %119 = vmatpush1.msra.mxu0 %v95
    %120 = vmatprep.subr.mxu0 %v92
    %121 = vmatpush1.msra.mxu0 %v91
    %122 = vmatprep.subr.mxu0 %v88
    %123 = vmatpush1.msra.mxu0 %v87
    %124 = vmatprep.subr.mxu0 %v84
    %125 = vmatpush1.msra.mxu0 %v83
    %126 = vmatprep.subr.mxu0 %v80
    %127 = vmatpush1.msra.mxu0 %v79
    %128 = vmatprep.subr.mxu0 %v76
    %129 = vmatpush1.msra.mxu0 %v75
    %130 = vmatprep.subr.mxu0 %v72
    %131 = vmatpush1.msra.mxu0 %v71
    %132 = vmatprep.subr.mxu0 %v68
    %133 = vmatpush1.msra.mxu0 %v67
    %134 = vmatprep.subr.mxu0 %v64
    %135 = vmatpush1.msra.mxu0 %v63
    %136 = vmatprep.subr.mxu0 %v60
    %137 = vmatpush1.msra.mxu0 %v59
    %138 = vmatprep.subr.mxu0 %v56
    %139 = vmatpush1.msra.mxu0 %v55
    %140 = vmatprep.subr.mxu0 %v52
    %141 = vmatpush1.msra.mxu0 %v51
    %142 = vmatprep.subr.mxu0 %v48
    %143 = vmatpush1.msra.mxu0 %v47
    %144 = vmatprep.subr.mxu0 %v44
    %145 = vmatpush1.msra.mxu0 %v43
    %146 = vmatprep.subr.mxu0 0.0
    %147 = vmatpush2.msra.mxu0 0.0
    %148 = vmatprep.subr.mxu0 0.0
    %149 = vmatpush2.msra.mxu0 0.0
    %150 = vmatprep.subr.mxu0 0.0
    %151 = vmatpush2.msra.mxu0 0.0
    %152 = vmatprep.subr.mxu0 0.0
    %153 = vmatpush2.msra.mxu0 0.0
    %154 = vmatprep.subr.mxu0 0.0
    %155 = vmatpush2.msra.mxu0 0.0
    %156 = vmatprep.subr.mxu0 0.0
    %157 = vmatpush2.msra.mxu0 0.0
    %158 = vmatprep.subr.mxu0 0.0
    %159 = vmatpush2.msra.mxu0 0.0
    %160 = vmatprep.subr.mxu0 0.0
    %161 = vmatpush2.msra.mxu0 0.0
    %162 = vmatprep.subr.mxu0 0.0
    %163 = vmatpush2.msra.mxu0 0.0
    %164 = vmatprep.subr.mxu0 0.0
    %165 = vmatpush2.msra.mxu0 0.0
    %166 = vmatprep.subr.mxu0 0.0
    %167 = vmatpush2.msra.mxu0 0.0
    %168 = vmatprep.subr.mxu0 0.0
    %169 = vmatpush2.msra.mxu0 0.0
    %170 = vmatprep.subr.mxu0 0.0
    %171 = vmatpush2.msra.mxu0 0.0
    %172 = vmatprep.subr.mxu0 0.0
    %173 = vmatpush2.msra.mxu0 0.0
    %174 = vmatprep.subr.mxu0 0.0
    %175 = vmatpush2.msra.mxu0 0.0
    %176 = vmatprep.subr.mxu0 0.0
    %177 = vmatpush2.msra.mxu0 0.0
    %178 = vmatprep.mubr.f32.mxu0 0.0
    %179 = vmatmul.mubr.f32.gmra.mxu0 %v113
    %v180 = vpop.f32.mrf.mxu0
    %v181 = vadd.f32 0.0, %v180
    %v182 = vpop.f32.mrf.mxu0
    %v183 = vadd.f32 0.0, %v182
    %184 = vdwg.mxu0
    %185 = vmatprep.subr.mxu0 %v106
    %186 = vmatpush1.msra.mxu0 %v105
    %187 = vmatprep.subr.mxu0 %v102
    %188 = vmatpush1.msra.mxu0 %v101
    %189 = vmatprep.subr.mxu0 %v98
    %190 = vmatpush1.msra.mxu0 %v97
    %191 = vmatprep.subr.mxu0 %v94
    %192 = vmatpush1.msra.mxu0 %v93
    %193 = vmatprep.subr.mxu0 %v90
    %194 = vmatpush1.msra.mxu0 %v89
    %195 = vmatprep.subr.mxu0 %v86
    %196 = vmatpush1.msra.mxu0 %v85
    %197 = vmatprep.subr.mxu0 %v82
    %198 = vmatpush1.msra.mxu0 %v81
    %199 = vmatprep.subr.mxu0 %v78
    %200 = vmatpush1.msra.mxu0 %v77
    %201 = vmatprep.subr.mxu0 %v74
    %202 = vmatpush1.msra.mxu0 %v73
    %203 = vmatprep.subr.mxu0 %v70
    %204 = vmatpush1.msra.mxu0 %v69
    %205 = vmatprep.subr.mxu0 %v66
    %206 = vmatpush1.msra.mxu0 %v65
    %207 = vmatprep.subr.mxu0 %v62
    %208 = vmatpush1.msra.mxu0 %v61
    %209 = vmatprep.subr.mxu0 %v58
    %210 = vmatpush1.msra.mxu0 %v57
    %211 = vmatprep.subr.mxu0 %v54
    %212 = vmatpush1.msra.mxu0 %v53
    %213 = vmatprep.subr.mxu0 %v50
    %214 = vmatpush1.msra.mxu0 %v49
    %215 = vmatprep.subr.mxu0 %v46
    %216 = vmatpush1.msra.mxu0 %v45
    %217 = vmatprep.subr.mxu0 0.0
    %218 = vmatpush2.msra.mxu0 0.0
    %219 = vmatprep.subr.mxu0 0.0
    %220 = vmatpush2.msra.mxu0 0.0
    %221 = vmatprep.subr.mxu0 0.0
    %222 = vmatpush2.msra.mxu0 0.0
    %223 = vmatprep.subr.mxu0 0.0
    %224 = vmatpush2.msra.mxu0 0.0
    %225 = vmatprep.subr.mxu0 0.0
    %226 = vmatpush2.msra.mxu0 0.0
    %227 = vmatprep.subr.mxu0 0.0
    %228 = vmatpush2.msra.mxu0 0.0
    %229 = vmatprep.subr.mxu0 0.0
    %230 = vmatpush2.msra.mxu0 0.0
    %231 = vmatprep.subr.mxu0 0.0
    %232 = vmatpush2.msra.mxu0 0.0
    %233 = vmatprep.subr.mxu0 0.0
    %234 = vmatpush2.msra.mxu0 0.0
    %235 = vmatprep.subr.mxu0 0.0
    %236 = vmatpush2.msra.mxu0 0.0
    %237 = vmatprep.subr.mxu0 0.0
    %238 = vmatpush2.msra.mxu0 0.0
    %239 = vmatprep.subr.mxu0 0.0
    %240 = vmatpush2.msra.mxu0 0.0
    %241 = vmatprep.subr.mxu0 0.0
    %242 = vmatpush2.msra.mxu0 0.0
    %243 = vmatprep.subr.mxu0 0.0
    %244 = vmatpush2.msra.mxu0 0.0
    %245 = vmatprep.subr.mxu0 0.0
    %246 = vmatpush2.msra.mxu0 0.0
    %247 = vmatprep.subr.mxu0 0.0
    %248 = vmatpush2.msra.mxu0 0.0
    %249 = vmatprep.mubr.f32.mxu0 0.0
    %250 = vmatmul.mubr.f32.gmra.mxu0 %v113
    %v251 = vpop.f32.mrf.mxu0
    %v252 = vadd.f32 0.0, %v251
    %v253 = vpop.f32.mrf.mxu0
    %v254 = vadd.f32 0.0, %v253
    %255 = vdwg.mxu0
    %v256 = vxor.u32 %v181, 2147483648
    %v257 = vxor.u32 %v183, 2147483648
    %v258 = vxor.u32 %v252, 2147483648
    %v259 = vmul.f32 %v256, 1.442695
    %v260 = vpow.pop %v259
    %v261 = vmul.f32 %v257, 1.442695
    %v262 = vpow.pop %v261
    %v263 = vmul.f32 %v258, 1.442695
    %v264 = vpow.pop %v263
    %v265 = vadd.f32 %v260, 1.0
    %v266 = vadd.f32 %v262, 1.0
    %v267 = vadd.f32 %v264, 1.0
    %v268 = vrcp.pop %v265
    %v269 = vmul.f32 1.0, %v268
    %v270 = vrcp.pop %v266
    %v271 = vmul.f32 1.0, %v270
    %v272 = vrcp.pop %v267
    %v273 = vmul.f32 1.0, %v272
    %v274 = vtanh.pop %v254
    %v275 = vmul.f32 %v271, 0.0
    %v276 = vmul.f32 %v269, %v274
    %v277 = vadd.f32 %v275, %v276
    %v278 = vtanh.pop %v277
    %v279 = vmul.f32 %v273, %v278
    %vm280 = vcmp.ge.s32.totalorder %v108, 5
    %vm281 = vcmp.lt.s32.totalorder %v108, 15
    %vm282 = vmand %vm280, %vm281
    %v283 = vsel %vm282, %v279, 0.0
    %v284 = vsel %vm282, %v277, 0.0
    %s285 = scalar_lea.vmem [#allocation2], 2
    %v286 = vld [vmem:[%s285] sm:$0x3]
    %v287 = vsel %vm111, %v286, %v283
    %288 = vmatprep.subr.mxu0 %v104
    %289 = vmatpush1.msra.mxu0 %v103
    %290 = vmatprep.subr.mxu0 %v100
    %291 = vmatpush1.msra.mxu0 %v99
    %292 = vmatprep.subr.mxu0 %v96
    %293 = vmatpush1.msra.mxu0 %v95
    %294 = vmatprep.subr.mxu0 %v92
    %295 = vmatpush1.msra.mxu0 %v91
    %296 = vmatprep.subr.mxu0 %v88
    %297 = vmatpush1.msra.mxu0 %v87
    %298 = vmatprep.subr.mxu0 %v84
    %299 = vmatpush1.msra.mxu0 %v83
    %300 = vmatprep.subr.mxu0 %v80
    %301 = vmatpush1.msra.mxu0 %v79
    %302 = vmatprep.subr.mxu0 %v76
    %303 = vmatpush1.msra.mxu0 %v75
    %304 = vmatprep.subr.mxu0 %v72
    %305 = vmatpush1.msra.mxu0 %v71
    %306 = vmatprep.subr.mxu0 %v68
    %307 = vmatpush1.msra.mxu0 %v67
    %308 = vmatprep.subr.mxu0 %v64
    %309 = vmatpush1.msra.mxu0 %v63
    %310 = vmatprep.subr.mxu0 %v60
    %311 = vmatpush1.msra.mxu0 %v59
    %312 = vmatprep.subr.mxu0 %v56
    %313 = vmatpush1.msra.mxu0 %v55
    %314 = vmatprep.subr.mxu0 %v52
    %315 = vmatpush1.msra.mxu0 %v51
    %316 = vmatprep.subr.mxu0 %v48
    %317 = vmatpush1.msra.mxu0 %v47
    %318 = vmatprep.subr.mxu0 %v44
    %319 = vmatpush1.msra.mxu0 %v43
    %320 = vmatprep.subr.mxu0 0.0
    %321 = vmatpush2.msra.mxu0 0.0
    %322 = vmatprep.subr.mxu0 0.0
    %323 = vmatpush2.msra.mxu0 0.0
    %324 = vmatprep.subr.mxu0 0.0
    %325 = vmatpush2.msra.mxu0 0.0
    %326 = vmatprep.subr.mxu0 0.0
    %327 = vmatpush2.msra.mxu0 0.0
    %328 = vmatprep.subr.mxu0 0.0
    %329 = vmatpush2.msra.mxu0 0.0
    %330 = vmatprep.subr.mxu0 0.0
    %331 = vmatpush2.msra.mxu0 0.0
    %332 = vmatprep.subr.mxu0 0.0
    %333 = vmatpush2.msra.mxu0 0.0
    %334 = vmatprep.subr.mxu0 0.0
    %335 = vmatpush2.msra.mxu0 0.0
    %336 = vmatprep.subr.mxu0 0.0
    %337 = vmatpush2.msra.mxu0 0.0
    %338 = vmatprep.subr.mxu0 0.0
    %339 = vmatpush2.msra.mxu0 0.0
    %340 = vmatprep.subr.mxu0 0.0
    %341 = vmatpush2.msra.mxu0 0.0
    %342 = vmatprep.subr.mxu0 0.0
    %343 = vmatpush2.msra.mxu0 0.0
    %344 = vmatprep.subr.mxu0 0.0
    %345 = vmatpush2.msra.mxu0 0.0
    %346 = vmatprep.subr.mxu0 0.0
    %347 = vmatpush2.msra.mxu0 0.0
    %348 = vmatprep.subr.mxu0 0.0
    %349 = vmatpush2.msra.mxu0 0.0
    %350 = vmatprep.subr.mxu0 0.0
    %351 = vmatpush2.msra.mxu0 0.0
    %352 = vmatprep.mubr.f32.mxu0 0.0
    %353 = vmatmul.mubr.f32.gmra.mxu0 %v287
    %v354 = vpop.f32.mrf.mxu0
    %v355 = vadd.f32 0.0, %v354
    %v356 = vpop.f32.mrf.mxu0
    %v357 = vadd.f32 0.0, %v356
    %358 = vdwg.mxu0
    %359 = vmatprep.subr.mxu0 %v106
    %360 = vmatpush1.msra.mxu0 %v105
    %361 = vmatprep.subr.mxu0 %v102
    %362 = vmatpush1.msra.mxu0 %v101
    %363 = vmatprep.subr.mxu0 %v98
    %364 = vmatpush1.msra.mxu0 %v97
    %365 = vmatprep.subr.mxu0 %v94
    %366 = vmatpush1.msra.mxu0 %v93
    %367 = vmatprep.subr.mxu0 %v90
    %368 = vmatpush1.msra.mxu0 %v89
    %369 = vmatprep.subr.mxu0 %v86
    %370 = vmatpush1.msra.mxu0 %v85
    %371 = vmatprep.subr.mxu0 %v82
    %372 = vmatpush1.msra.mxu0 %v81
    %373 = vmatprep.subr.mxu0 %v78
    %374 = vmatpush1.msra.mxu0 %v77
    %375 = vmatprep.subr.mxu0 %v74
    %376 = vmatpush1.msra.mxu0 %v73
    %377 = vmatprep.subr.mxu0 %v70
    %378 = vmatpush1.msra.mxu0 %v69
    %379 = vmatprep.subr.mxu0 %v66
    %380 = vmatpush1.msra.mxu0 %v65
    %381 = vmatprep.subr.mxu0 %v62
    %382 = vmatpush1.msra.mxu0 %v61
    %383 = vmatprep.subr.mxu0 %v58
    %384 = vmatpush1.msra.mxu0 %v57
    %385 = vmatprep.subr.mxu0 %v54
    %386 = vmatpush1.msra.mxu0 %v53
    %387 = vmatprep.subr.mxu0 %v50
    %388 = vmatpush1.msra.mxu0 %v49
    %389 = vmatprep.subr.mxu0 %v46
    %390 = vmatpush1.msra.mxu0 %v45
    %391 = vmatprep.subr.mxu0 0.0
    %392 = vmatpush2.msra.mxu0 0.0
    %393 = vmatprep.subr.mxu0 0.0
    %394 = vmatpush2.msra.mxu0 0.0
    %395 = vmatprep.subr.mxu0 0.0
    %396 = vmatpush2.msra.mxu0 0.0
    %397 = vmatprep.subr.mxu0 0.0
    %398 = vmatpush2.msra.mxu0 0.0
    %399 = vmatprep.subr.mxu0 0.0
    %400 = vmatpush2.msra.mxu0 0.0
    %401 = vmatprep.subr.mxu0 0.0
    %402 = vmatpush2.msra.mxu0 0.0
    %403 = vmatprep.subr.mxu0 0.0
    %404 = vmatpush2.msra.mxu0 0.0
    %405 = vmatprep.subr.mxu0 0.0
    %406 = vmatpush2.msra.mxu0 0.0
    %407 = vmatprep.subr.mxu0 0.0
    %408 = vmatpush2.msra.mxu0 0.0
    %409 = vmatprep.subr.mxu0 0.0
    %410 = vmatpush2.msra.mxu0 0.0
    %411 = vmatprep.subr.mxu0 0.0
    %412 = vmatpush2.msra.mxu0 0.0
    %413 = vmatprep.subr.mxu0 0.0
    %414 = vmatpush2.msra.mxu0 0.0
    %415 = vmatprep.subr.mxu0 0.0
    %416 = vmatpush2.msra.mxu0 0.0
    %417 = vmatprep.subr.mxu0 0.0
    %418 = vmatpush2.msra.mxu0 0.0
    %419 = vmatprep.subr.mxu0 0.0
    %420 = vmatpush2.msra.mxu0 0.0
    %421 = vmatprep.subr.mxu0 0.0
    %422 = vmatpush2.msra.mxu0 0.0
    %423 = vmatprep.mubr.f32.mxu0 0.0
    %424 = vmatmul.mubr.f32.gmra.mxu0 %v287
    %v425 = vpop.f32.mrf.mxu0
    %v426 = vadd.f32 0.0, %v425
    %v427 = vpop.f32.mrf.mxu0
    %v428 = vadd.f32 0.0, %v427
    %429 = vdwg.mxu0
    %v430 = vxor.u32 %v355, 2147483648
    %v431 = vxor.u32 %v357, 2147483648
    %v432 = vxor.u32 %v426, 2147483648
    %v433 = vmul.f32 %v430, 1.442695
    %v434 = vpow.pop %v433
    %v435 = vmul.f32 %v431, 1.442695
    %v436 = vpow.pop %v435
    %v437 = vmul.f32 %v432, 1.442695
    %v438 = vpow.pop %v437
    %v439 = vadd.f32 %v434, 1.0
    %v440 = vadd.f32 %v436, 1.0
    %v441 = vadd.f32 %v438, 1.0
    %v442 = vrcp.pop %v439
    %v443 = vmul.f32 1.0, %v442
    %v444 = vrcp.pop %v440
    %v445 = vmul.f32 1.0, %v444
    %v446 = vrcp.pop %v441
    %v447 = vmul.f32 1.0, %v446
    %v448 = vtanh.pop %v428
    %v449 = vmul.f32 %v445, %v284
    %v450 = vmul.f32 %v443, %v448
    %v451 = vadd.f32 %v449, %v450
    %v452 = vtanh.pop %v451
    %v453 = vmul.f32 %v447, %v452
    %vm454 = vcmp.lt.s32.totalorder %v108, 25
    %vm455 = vmand %vm280, %vm454
    %v456 = vsel %vm455, %v453, %v283
    %v457 = vsel %vm455, %v451, %v284
    %s458 = scalar_lea.vmem [#allocation2], 4
    %v459 = vld [vmem:[%s458] sm:$0x3]
    %v460 = vsel %vm111, %v459, %v456
    %461 = vmatprep.subr.mxu0 %v104
    %462 = vmatpush1.msra.mxu0 %v103
    %463 = vmatprep.subr.mxu0 %v100
    %464 = vmatpush1.msra.mxu0 %v99
    %465 = vmatprep.subr.mxu0 %v96
    %466 = vmatpush1.msra.mxu0 %v95
    %467 = vmatprep.subr.mxu0 %v92
    %468 = vmatpush1.msra.mxu0 %v91
    %469 = vmatprep.subr.mxu0 %v88
    %470 = vmatpush1.msra.mxu0 %v87
    %471 = vmatprep.subr.mxu0 %v84
    %472 = vmatpush1.msra.mxu0 %v83
    %473 = vmatprep.subr.mxu0 %v80
    %474 = vmatpush1.msra.mxu0 %v79
    %475 = vmatprep.subr.mxu0 %v76
    %476 = vmatpush1.msra.mxu0 %v75
    %477 = vmatprep.subr.mxu0 %v72
    %478 = vmatpush1.msra.mxu0 %v71
    %479 = vmatprep.subr.mxu0 %v68
    %480 = vmatpush1.msra.mxu0 %v67
    %481 = vmatprep.subr.mxu0 %v64
    %482 = vmatpush1.msra.mxu0 %v63
    %483 = vmatprep.subr.mxu0 %v60
    %484 = vmatpush1.msra.mxu0 %v59
    %485 = vmatprep.subr.mxu0 %v56
    %486 = vmatpush1.msra.mxu0 %v55
    %487 = vmatprep.subr.mxu0 %v52
    %488 = vmatpush1.msra.mxu0 %v51
    %489 = vmatprep.subr.mxu0 %v48
    %490 = vmatpush1.msra.mxu0 %v47
    %491 = vmatprep.subr.mxu0 %v44
    %492 = vmatpush1.msra.mxu0 %v43
    %493 = vmatprep.subr.mxu0 0.0
    %494 = vmatpush2.msra.mxu0 0.0
    %495 = vmatprep.subr.mxu0 0.0
    %496 = vmatpush2.msra.mxu0 0.0
    %497 = vmatprep.subr.mxu0 0.0
    %498 = vmatpush2.msra.mxu0 0.0
    %499 = vmatprep.subr.mxu0 0.0
    %500 = vmatpush2.msra.mxu0 0.0
    %501 = vmatprep.subr.mxu0 0.0
    %502 = vmatpush2.msra.mxu0 0.0
    %503 = vmatprep.subr.mxu0 0.0
    %504 = vmatpush2.msra.mxu0 0.0
    %505 = vmatprep.subr.mxu0 0.0
    %506 = vmatpush2.msra.mxu0 0.0
    %507 = vmatprep.subr.mxu0 0.0
    %508 = vmatpush2.msra.mxu0 0.0
    %509 = vmatprep.subr.mxu0 0.0
    %510 = vmatpush2.msra.mxu0 0.0
    %511 = vmatprep.subr.mxu0 0.0
    %512 = vmatpush2.msra.mxu0 0.0
    %513 = vmatprep.subr.mxu0 0.0
    %514 = vmatpush2.msra.mxu0 0.0
    %515 = vmatprep.subr.mxu0 0.0
    %516 = vmatpush2.msra.mxu0 0.0
    %517 = vmatprep.subr.mxu0 0.0
    %518 = vmatpush2.msra.mxu0 0.0
    %519 = vmatprep.subr.mxu0 0.0
    %520 = vmatpush2.msra.mxu0 0.0
    %521 = vmatprep.subr.mxu0 0.0
    %522 = vmatpush2.msra.mxu0 0.0
    %523 = vmatprep.subr.mxu0 0.0
    %524 = vmatpush2.msra.mxu0 0.0
    %525 = vmatprep.mubr.f32.mxu0 0.0
    %526 = vmatmul.mubr.f32.gmra.mxu0 %v460
    %v527 = vpop.f32.mrf.mxu0
    %v528 = vadd.f32 0.0, %v527
    %v529 = vpop.f32.mrf.mxu0
    %v530 = vadd.f32 0.0, %v529
    %531 = vdwg.mxu0
    %532 = vmatprep.subr.mxu0 %v106
    %533 = vmatpush1.msra.mxu0 %v105
    %534 = vmatprep.subr.mxu0 %v102
    %535 = vmatpush1.msra.mxu0 %v101
    %536 = vmatprep.subr.mxu0 %v98
    %537 = vmatpush1.msra.mxu0 %v97
    %538 = vmatprep.subr.mxu0 %v94
    %539 = vmatpush1.msra.mxu0 %v93
    %540 = vmatprep.subr.mxu0 %v90
    %541 = vmatpush1.msra.mxu0 %v89
    %542 = vmatprep.subr.mxu0 %v86
    %543 = vmatpush1.msra.mxu0 %v85
    %544 = vmatprep.subr.mxu0 %v82
    %545 = vmatpush1.msra.mxu0 %v81
    %546 = vmatprep.subr.mxu0 %v78
    %547 = vmatpush1.msra.mxu0 %v77
    %548 = vmatprep.subr.mxu0 %v74
    %549 = vmatpush1.msra.mxu0 %v73
    %550 = vmatprep.subr.mxu0 %v70
    %551 = vmatpush1.msra.mxu0 %v69
    %552 = vmatprep.subr.mxu0 %v66
    %553 = vmatpush1.msra.mxu0 %v65
    %554 = vmatprep.subr.mxu0 %v62
    %555 = vmatpush1.msra.mxu0 %v61
    %556 = vmatprep.subr.mxu0 %v58
    %557 = vmatpush1.msra.mxu0 %v57
    %558 = vmatprep.subr.mxu0 %v54
    %559 = vmatpush1.msra.mxu0 %v53
    %560 = vmatprep.subr.mxu0 %v50
    %561 = vmatpush1.msra.mxu0 %v49
    %562 = vmatprep.subr.mxu0 %v46
    %563 = vmatpush1.msra.mxu0 %v45
    %564 = vmatprep.subr.mxu0 0.0
    %565 = vmatpush2.msra.mxu0 0.0
    %566 = vmatprep.subr.mxu0 0.0
    %567 = vmatpush2.msra.mxu0 0.0
    %568 = vmatprep.subr.mxu0 0.0
    %569 = vmatpush2.msra.mxu0 0.0
    %570 = vmatprep.subr.mxu0 0.0
    %571 = vmatpush2.msra.mxu0 0.0
    %572 = vmatprep.subr.mxu0 0.0
    %573 = vmatpush2.msra.mxu0 0.0
    %574 = vmatprep.subr.mxu0 0.0
    %575 = vmatpush2.msra.mxu0 0.0
    %576 = vmatprep.subr.mxu0 0.0
    %577 = vmatpush2.msra.mxu0 0.0
    %578 = vmatprep.subr.mxu0 0.0
    %579 = vmatpush2.msra.mxu0 0.0
    %580 = vmatprep.subr.mxu0 0.0
    %581 = vmatpush2.msra.mxu0 0.0
    %582 = vmatprep.subr.mxu0 0.0
    %583 = vmatpush2.msra.mxu0 0.0
    %584 = vmatprep.subr.mxu0 0.0
    %585 = vmatpush2.msra.mxu0 0.0
    %586 = vmatprep.subr.mxu0 0.0
    %587 = vmatpush2.msra.mxu0 0.0
    %588 = vmatprep.subr.mxu0 0.0
    %589 = vmatpush2.msra.mxu0 0.0
    %590 = vmatprep.subr.mxu0 0.0
    %591 = vmatpush2.msra.mxu0 0.0
    %592 = vmatprep.subr.mxu0 0.0
    %593 = vmatpush2.msra.mxu0 0.0
    %594 = vmatprep.subr.mxu0 0.0
    %595 = vmatpush2.msra.mxu0 0.0
    %596 = vmatprep.mubr.f32.mxu0 0.0
    %597 = vmatmul.mubr.f32.gmra.mxu0 %v460
    %v598 = vpop.f32.mrf.mxu0
    %v599 = vadd.f32 0.0, %v598
    %v600 = vpop.f32.mrf.mxu0
    %v601 = vadd.f32 0.0, %v600
    %602 = vdwg.mxu0
    %v603 = vxor.u32 %v528, 2147483648
    %v604 = vxor.u32 %v530, 2147483648
    %v605 = vxor.u32 %v599, 2147483648
    %v606 = vmul.f32 %v603, 1.442695
    %v607 = vpow.pop %v606
    %v608 = vmul.f32 %v604, 1.442695
    %v609 = vpow.pop %v608
    %v610 = vmul.f32 %v605, 1.442695
    %v611 = vpow.pop %v610
    %v612 = vadd.f32 %v607, 1.0
    %v613 = vadd.f32 %v609, 1.0
    %v614 = vadd.f32 %v611, 1.0
    %v615 = vrcp.pop %v612
    %v616 = vmul.f32 1.0, %v615
    %v617 = vrcp.pop %v613
    %v618 = vmul.f32 1.0, %v617
    %v619 = vrcp.pop %v614
    %v620 = vmul.f32 1.0, %v619
    %v621 = vtanh.pop %v601
    %v622 = vmul.f32 %v618, %v457
    %v623 = vmul.f32 %v616, %v621
    %v624 = vadd.f32 %v622, %v623
    %v625 = vtanh.pop %v624
    %v626 = vmul.f32 %v620, %v625
    %vm627 = vcmp.lt.s32.totalorder %v108, 35
    %vm628 = vmand %vm280, %vm627
    %v629 = vsel %vm628, %v626, %v456
    %v630 = vsel %vm628, %v624, %v457
    %631 = vst [vmem:[#allocation7] sm:$0x3] %v626
    %s632 = scalar_lea.vmem [#allocation2], 6
    %v633 = vld [vmem:[%s632] sm:$0x3]
    %v634 = vsel %vm111, %v633, %v629
    %635 = vmatprep.subr.mxu0 %v104
    %636 = vmatpush1.msra.mxu0 %v103
    %637 = vmatprep.subr.mxu0 %v100
    %638 = vmatpush1.msra.mxu0 %v99
    %639 = vmatprep.subr.mxu0 %v96
    %640 = vmatpush1.msra.mxu0 %v95
    %641 = vmatprep.subr.mxu0 %v92
    %642 = vmatpush1.msra.mxu0 %v91
    %643 = vmatprep.subr.mxu0 %v88
    %644 = vmatpush1.msra.mxu0 %v87
    %645 = vmatprep.subr.mxu0 %v84
    %646 = vmatpush1.msra.mxu0 %v83
    %647 = vmatprep.subr.mxu0 %v80
    %648 = vmatpush1.msra.mxu0 %v79
    %649 = vmatprep.subr.mxu0 %v76
    %650 = vmatpush1.msra.mxu0 %v75
    %651 = vmatprep.subr.mxu0 %v72
    %652 = vmatpush1.msra.mxu0 %v71
    %653 = vmatprep.subr.mxu0 %v68
    %654 = vmatpush1.msra.mxu0 %v67
    %655 = vmatprep.subr.mxu0 %v64
    %656 = vmatpush1.msra.mxu0 %v63
    %657 = vmatprep.subr.mxu0 %v60
    %658 = vmatpush1.msra.mxu0 %v59
    %659 = vmatprep.subr.mxu0 %v56
    %660 = vmatpush1.msra.mxu0 %v55
    %661 = vmatprep.subr.mxu0 %v52
    %662 = vmatpush1.msra.mxu0 %v51
    %663 = vmatprep.subr.mxu0 %v48
    %664 = vmatpush1.msra.mxu0 %v47
    %665 = vmatprep.subr.mxu0 %v44
    %666 = vmatpush1.msra.mxu0 %v43
    %667 = vmatprep.subr.mxu0 0.0
    %668 = vmatpush2.msra.mxu0 0.0
    %669 = vmatprep.subr.mxu0 0.0
    %670 = vmatpush2.msra.mxu0 0.0
    %671 = vmatprep.subr.mxu0 0.0
    %672 = vmatpush2.msra.mxu0 0.0
    %673 = vmatprep.subr.mxu0 0.0
    %674 = vmatpush2.msra.mxu0 0.0
    %675 = vmatprep.subr.mxu0 0.0
    %676 = vmatpush2.msra.mxu0 0.0
    %677 = vmatprep.subr.mxu0 0.0
    %678 = vmatpush2.msra.mxu0 0.0
    %679 = vmatprep.subr.mxu0 0.0
    %680 = vmatpush2.msra.mxu0 0.0
    %681 = vmatprep.subr.mxu0 0.0
    %682 = vmatpush2.msra.mxu0 0.0
    %683 = vmatprep.subr.mxu0 0.0
    %684 = vmatpush2.msra.mxu0 0.0
    %685 = vmatprep.subr.mxu0 0.0
    %686 = vmatpush2.msra.mxu0 0.0
    %687 = vmatprep.subr.mxu0 0.0
    %688 = vmatpush2.msra.mxu0 0.0
    %689 = vmatprep.subr.mxu0 0.0
    %690 = vmatpush2.msra.mxu0 0.0
    %691 = vmatprep.subr.mxu0 0.0
    %692 = vmatpush2.msra.mxu0 0.0
    %693 = vmatprep.subr.mxu0 0.0
    %694 = vmatpush2.msra.mxu0 0.0
    %695 = vmatprep.subr.mxu0 0.0
    %696 = vmatpush2.msra.mxu0 0.0
    %697 = vmatprep.subr.mxu0 0.0
    %698 = vmatpush2.msra.mxu0 0.0
    %699 = vmatprep.mubr.f32.mxu0 0.0
    %700 = vmatmul.mubr.f32.gmra.mxu0 %v634
    %v701 = vpop.f32.mrf.mxu0
    %v702 = vadd.f32 0.0, %v701
    %v703 = vpop.f32.mrf.mxu0
    %v704 = vadd.f32 0.0, %v703
    %705 = vdwg.mxu0
    %706 = vmatprep.subr.mxu0 %v106
    %707 = vmatpush1.msra.mxu0 %v105
    %708 = vmatprep.subr.mxu0 %v102
    %709 = vmatpush1.msra.mxu0 %v101
    %710 = vmatprep.subr.mxu0 %v98
    %711 = vmatpush1.msra.mxu0 %v97
    %712 = vmatprep.subr.mxu0 %v94
    %713 = vmatpush1.msra.mxu0 %v93
    %714 = vmatprep.subr.mxu0 %v90
    %715 = vmatpush1.msra.mxu0 %v89
    %716 = vmatprep.subr.mxu0 %v86
    %717 = vmatpush1.msra.mxu0 %v85
    %718 = vmatprep.subr.mxu0 %v82
    %719 = vmatpush1.msra.mxu0 %v81
    %720 = vmatprep.subr.mxu0 %v78
    %721 = vmatpush1.msra.mxu0 %v77
    %722 = vmatprep.subr.mxu0 %v74
    %723 = vmatpush1.msra.mxu0 %v73
    %724 = vmatprep.subr.mxu0 %v70
    %725 = vmatpush1.msra.mxu0 %v69
    %726 = vmatprep.subr.mxu0 %v66
    %727 = vmatpush1.msra.mxu0 %v65
    %728 = vmatprep.subr.mxu0 %v62
    %729 = vmatpush1.msra.mxu0 %v61
    %730 = vmatprep.subr.mxu0 %v58
    %731 = vmatpush1.msra.mxu0 %v57
    %732 = vmatprep.subr.mxu0 %v54
    %733 = vmatpush1.msra.mxu0 %v53
    %734 = vmatprep.subr.mxu0 %v50
    %735 = vmatpush1.msra.mxu0 %v49
    %736 = vmatprep.subr.mxu0 %v46
    %737 = vmatpush1.msra.mxu0 %v45
    %738 = vmatprep.subr.mxu0 0.0
    %739 = vmatpush2.msra.mxu0 0.0
    %740 = vmatprep.subr.mxu0 0.0
    %741 = vmatpush2.msra.mxu0 0.0
    %742 = vmatprep.subr.mxu0 0.0
    %743 = vmatpush2.msra.mxu0 0.0
    %744 = vmatprep.subr.mxu0 0.0
    %745 = vmatpush2.msra.mxu0 0.0
    %746 = vmatprep.subr.mxu0 0.0
    %747 = vmatpush2.msra.mxu0 0.0
    %748 = vmatprep.subr.mxu0 0.0
    %749 = vmatpush2.msra.mxu0 0.0
    %750 = vmatprep.subr.mxu0 0.0
    %751 = vmatpush2.msra.mxu0 0.0
    %752 = vmatprep.subr.mxu0 0.0
    %753 = vmatpush2.msra.mxu0 0.0
    %754 = vmatprep.subr.mxu0 0.0
    %755 = vmatpush2.msra.mxu0 0.0
    %756 = vmatprep.subr.mxu0 0.0
    %757 = vmatpush2.msra.mxu0 0.0
    %758 = vmatprep.subr.mxu0 0.0
    %759 = vmatpush2.msra.mxu0 0.0
    %760 = vmatprep.subr.mxu0 0.0
    %761 = vmatpush2.msra.mxu0 0.0
    %762 = vmatprep.subr.mxu0 0.0
    %763 = vmatpush2.msra.mxu0 0.0
    %764 = vmatprep.subr.mxu0 0.0
    %765 = vmatpush2.msra.mxu0 0.0
    %766 = vmatprep.subr.mxu0 0.0
    %767 = vmatpush2.msra.mxu0 0.0
    %768 = vmatprep.subr.mxu0 0.0
    %769 = vmatpush2.msra.mxu0 0.0
    %770 = vmatprep.mubr.f32.mxu0 0.0
    %771 = vmatmul.mubr.f32.gmra.mxu0 %v634
    %v772 = vpop.f32.mrf.mxu0
    %v773 = vadd.f32 0.0, %v772
    %v774 = vpop.f32.mrf.mxu0
    %v775 = vadd.f32 0.0, %v774
    %776 = vdwg.mxu0
    %v777 = vxor.u32 %v702, 2147483648
    %v778 = vxor.u32 %v704, 2147483648
    %v779 = vxor.u32 %v773, 2147483648
    %v780 = vmul.f32 %v777, 1.442695
    %v781 = vpow.pop %v780
    %v782 = vmul.f32 %v778, 1.442695
    %v783 = vpow.pop %v782
    %v784 = vmul.f32 %v779, 1.442695
    %v785 = vpow.pop %v784
    %v786 = vadd.f32 %v781, 1.0
    %v787 = vadd.f32 %v783, 1.0
    %v788 = vadd.f32 %v785, 1.0
    %v789 = vrcp.pop %v786
    %v790 = vmul.f32 1.0, %v789
    %v791 = vrcp.pop %v787
    %v792 = vmul.f32 1.0, %v791
    %v793 = vrcp.pop %v788
    %v794 = vmul.f32 1.0, %v793
    %v795 = vtanh.pop %v775
    %v796 = vmul.f32 %v792, %v630
    %v797 = vmul.f32 %v790, %v795
    %v798 = vadd.f32 %v796, %v797
    %v799 = vtanh.pop %v798
    %v800 = vmul.f32 %v794, %v799
    %v801 = vsel %vm628, %v800, %v456
    %v802 = vsel %vm628, %v798, %v457
    %s803 = scalar_lea.vmem [#allocation7], 2
    %804 = vst [vmem:[%s803] sm:$0x3] %v800
    %s805 = scalar_lea.vmem [#allocation2], 8
    %v806 = vld [vmem:[%s805] sm:$0x3]
    %v807 = vsel %vm111, %v806, %v801
    %808 = vmatprep.subr.mxu0 %v104
    %809 = vmatpush1.msra.mxu0 %v103
    %810 = vmatprep.subr.mxu0 %v100
    %811 = vmatpush1.msra.mxu0 %v99
    %812 = vmatprep.subr.mxu0 %v96
    %813 = vmatpush1.msra.mxu0 %v95
    %814 = vmatprep.subr.mxu0 %v92
    %815 = vmatpush1.msra.mxu0 %v91
    %816 = vmatprep.subr.mxu0 %v88
    %817 = vmatpush1.msra.mxu0 %v87
    %818 = vmatprep.subr.mxu0 %v84
    %819 = vmatpush1.msra.mxu0 %v83
    %820 = vmatprep.subr.mxu0 %v80
    %821 = vmatpush1.msra.mxu0 %v79
    %822 = vmatprep.subr.mxu0 %v76
    %823 = vmatpush1.msra.mxu0 %v75
    %824 = vmatprep.subr.mxu0 %v72
    %825 = vmatpush1.msra.mxu0 %v71
    %826 = vmatprep.subr.mxu0 %v68
    %827 = vmatpush1.msra.mxu0 %v67
    %828 = vmatprep.subr.mxu0 %v64
    %829 = vmatpush1.msra.mxu0 %v63
    %830 = vmatprep.subr.mxu0 %v60
    %831 = vmatpush1.msra.mxu0 %v59
    %832 = vmatprep.subr.mxu0 %v56
    %833 = vmatpush1.msra.mxu0 %v55
    %834 = vmatprep.subr.mxu0 %v52
    %835 = vmatpush1.msra.mxu0 %v51
    %836 = vmatprep.subr.mxu0 %v48
    %837 = vmatpush1.msra.mxu0 %v47
    %838 = vmatprep.subr.mxu0 %v44
    %839 = vmatpush1.msra.mxu0 %v43
    %840 = vmatprep.subr.mxu0 0.0
    %841 = vmatpush2.msra.mxu0 0.0
    %842 = vmatprep.subr.mxu0 0.0
    %843 = vmatpush2.msra.mxu0 0.0
    %844 = vmatprep.subr.mxu0 0.0
    %845 = vmatpush2.msra.mxu0 0.0
    %846 = vmatprep.subr.mxu0 0.0
    %847 = vmatpush2.msra.mxu0 0.0
    %848 = vmatprep.subr.mxu0 0.0
    %849 = vmatpush2.msra.mxu0 0.0
    %850 = vmatprep.subr.mxu0 0.0
    %851 = vmatpush2.msra.mxu0 0.0
    %852 = vmatprep.subr.mxu0 0.0
    %853 = vmatpush2.msra.mxu0 0.0
    %854 = vmatprep.subr.mxu0 0.0
    %855 = vmatpush2.msra.mxu0 0.0
    %856 = vmatprep.subr.mxu0 0.0
    %857 = vmatpush2.msra.mxu0 0.0
    %858 = vmatprep.subr.mxu0 0.0
    %859 = vmatpush2.msra.mxu0 0.0
    %860 = vmatprep.subr.mxu0 0.0
    %861 = vmatpush2.msra.mxu0 0.0
    %862 = vmatprep.subr.mxu0 0.0
    %863 = vmatpush2.msra.mxu0 0.0
    %864 = vmatprep.subr.mxu0 0.0
    %865 = vmatpush2.msra.mxu0 0.0
    %866 = vmatprep.subr.mxu0 0.0
    %867 = vmatpush2.msra.mxu0 0.0
    %868 = vmatprep.subr.mxu0 0.0
    %869 = vmatpush2.msra.mxu0 0.0
    %870 = vmatprep.subr.mxu0 0.0
    %871 = vmatpush2.msra.mxu0 0.0
    %872 = vmatprep.mubr.f32.mxu0 0.0
    %873 = vmatmul.mubr.f32.gmra.mxu0 %v807
    %v874 = vpop.f32.mrf.mxu0
    %v875 = vadd.f32 0.0, %v874
    %v876 = vpop.f32.mrf.mxu0
    %v877 = vadd.f32 0.0, %v876
    %878 = vdwg.mxu0
    %879 = vmatprep.subr.mxu0 %v106
    %880 = vmatpush1.msra.mxu0 %v105
    %881 = vmatprep.subr.mxu0 %v102
    %882 = vmatpush1.msra.mxu0 %v101
    %883 = vmatprep.subr.mxu0 %v98
    %884 = vmatpush1.msra.mxu0 %v97
    %885 = vmatprep.subr.mxu0 %v94
    %886 = vmatpush1.msra.mxu0 %v93
    %887 = vmatprep.subr.mxu0 %v90
    %888 = vmatpush1.msra.mxu0 %v89
    %889 = vmatprep.subr.mxu0 %v86
    %890 = vmatpush1.msra.mxu0 %v85
    %891 = vmatprep.subr.mxu0 %v82
    %892 = vmatpush1.msra.mxu0 %v81
    %893 = vmatprep.subr.mxu0 %v78
    %894 = vmatpush1.msra.mxu0 %v77
    %895 = vmatprep.subr.mxu0 %v74
    %896 = vmatpush1.msra.mxu0 %v73
    %897 = vmatprep.subr.mxu0 %v70
    %898 = vmatpush1.msra.mxu0 %v69
    %899 = vmatprep.subr.mxu0 %v66
    %900 = vmatpush1.msra.mxu0 %v65
    %901 = vmatprep.subr.mxu0 %v62
    %902 = vmatpush1.msra.mxu0 %v61
    %903 = vmatprep.subr.mxu0 %v58
    %904 = vmatpush1.msra.mxu0 %v57
    %905 = vmatprep.subr.mxu0 %v54
    %906 = vmatpush1.msra.mxu0 %v53
    %907 = vmatprep.subr.mxu0 %v50
    %908 = vmatpush1.msra.mxu0 %v49
    %909 = vmatprep.subr.mxu0 %v46
    %910 = vmatpush1.msra.mxu0 %v45
    %911 = vmatprep.subr.mxu0 0.0
    %912 = vmatpush2.msra.mxu0 0.0
    %913 = vmatprep.subr.mxu0 0.0
    %914 = vmatpush2.msra.mxu0 0.0
    %915 = vmatprep.subr.mxu0 0.0
    %916 = vmatpush2.msra.mxu0 0.0
    %917 = vmatprep.subr.mxu0 0.0
    %918 = vmatpush2.msra.mxu0 0.0
    %919 = vmatprep.subr.mxu0 0.0
    %920 = vmatpush2.msra.mxu0 0.0
    %921 = vmatprep.subr.mxu0 0.0
    %922 = vmatpush2.msra.mxu0 0.0
    %923 = vmatprep.subr.mxu0 0.0
    %924 = vmatpush2.msra.mxu0 0.0
    %925 = vmatprep.subr.mxu0 0.0
    %926 = vmatpush2.msra.mxu0 0.0
    %927 = vmatprep.subr.mxu0 0.0
    %928 = vmatpush2.msra.mxu0 0.0
    %929 = vmatprep.subr.mxu0 0.0
    %930 = vmatpush2.msra.mxu0 0.0
    %931 = vmatprep.subr.mxu0 0.0
    %932 = vmatpush2.msra.mxu0 0.0
    %933 = vmatprep.subr.mxu0 0.0
    %934 = vmatpush2.msra.mxu0 0.0
    %935 = vmatprep.subr.mxu0 0.0
    %936 = vmatpush2.msra.mxu0 0.0
    %937 = vmatprep.subr.mxu0 0.0
    %938 = vmatpush2.msra.mxu0 0.0
    %939 = vmatprep.subr.mxu0 0.0
    %940 = vmatpush2.msra.mxu0 0.0
    %941 = vmatprep.subr.mxu0 0.0
    %942 = vmatpush2.msra.mxu0 0.0
    %943 = vmatprep.mubr.f32.mxu0 0.0
    %944 = vmatmul.mubr.f32.gmra.mxu0 %v807
    %v945 = vpop.f32.mrf.mxu0
    %v946 = vadd.f32 0.0, %v945
    %v947 = vpop.f32.mrf.mxu0
    %v948 = vadd.f32 0.0, %v947
    %949 = vdwg.mxu0
    %v950 = vxor.u32 %v875, 2147483648
    %v951 = vxor.u32 %v877, 2147483648
    %v952 = vxor.u32 %v946, 2147483648
    %v953 = vmul.f32 %v950, 1.442695
    %v954 = vpow.pop %v953
    %v955 = vmul.f32 %v951, 1.442695
    %v956 = vpow.pop %v955
    %v957 = vmul.f32 %v952, 1.442695
    %v958 = vpow.pop %v957
    %v959 = vadd.f32 %v954, 1.0
    %v960 = vadd.f32 %v956, 1.0
    %v961 = vadd.f32 %v958, 1.0
    %v962 = vrcp.pop %v959
    %v963 = vmul.f32 1.0, %v962
    %v964 = vrcp.pop %v960
    %v965 = vmul.f32 1.0, %v964
    %v966 = vrcp.pop %v961
    %v967 = vmul.f32 1.0, %v966
    %v968 = vtanh.pop %v948
    %v969 = vmul.f32 %v965, %v802
    %v970 = vmul.f32 %v963, %v968
    %v971 = vadd.f32 %v969, %v970
    %v972 = vtanh.pop %v971
    %v973 = vmul.f32 %v967, %v972
    %v974 = vsel %vm628, %v973, %v456
    %v975 = vsel %vm628, %v971, %v457
    %s976 = scalar_lea.vmem [#allocation7], 4
    %977 = vst [vmem:[%s976] sm:$0x3] %v973
    %s978 = scalar_lea.vmem [#allocation2], 10
    %v979 = vld [vmem:[%s978] sm:$0x3]
    %v980 = vsel %vm111, %v979, %v974
    %981 = vmatprep.subr.mxu0 %v104
    %982 = vmatpush1.msra.mxu0 %v103
    %983 = vmatprep.subr.mxu0 %v100
    %984 = vmatpush1.msra.mxu0 %v99
    %985 = vmatprep.subr.mxu0 %v96
    %986 = vmatpush1.msra.mxu0 %v95
    %987 = vmatprep.subr.mxu0 %v92
    %988 = vmatpush1.msra.mxu0 %v91
    %989 = vmatprep.subr.mxu0 %v88
    %990 = vmatpush1.msra.mxu0 %v87
    %991 = vmatprep.subr.mxu0 %v84
    %992 = vmatpush1.msra.mxu0 %v83
    %993 = vmatprep.subr.mxu0 %v80
    %994 = vmatpush1.msra.mxu0 %v79
    %995 = vmatprep.subr.mxu0 %v76
    %996 = vmatpush1.msra.mxu0 %v75
    %997 = vmatprep.subr.mxu0 %v72
    %998 = vmatpush1.msra.mxu0 %v71
    %999 = vmatprep.subr.mxu0 %v68
    %1000 = vmatpush1.msra.mxu0 %v67
    %1001 = vmatprep.subr.mxu0 %v64
    %1002 = vmatpush1.msra.mxu0 %v63
    %1003 = vmatprep.subr.mxu0 %v60
    %1004 = vmatpush1.msra.mxu0 %v59
    %1005 = vmatprep.subr.mxu0 %v56
    %1006 = vmatpush1.msra.mxu0 %v55
    %1007 = vmatprep.subr.mxu0 %v52
    %1008 = vmatpush1.msra.mxu0 %v51
    %1009 = vmatprep.subr.mxu0 %v48
    %1010 = vmatpush1.msra.mxu0 %v47
    %1011 = vmatprep.subr.mxu0 %v44
    %1012 = vmatpush1.msra.mxu0 %v43
    %1013 = vmatprep.subr.mxu0 0.0
    %1014 = vmatpush2.msra.mxu0 0.0
    %1015 = vmatprep.subr.mxu0 0.0
    %1016 = vmatpush2.msra.mxu0 0.0
    %1017 = vmatprep.subr.mxu0 0.0
    %1018 = vmatpush2.msra.mxu0 0.0
    %1019 = vmatprep.subr.mxu0 0.0
    %1020 = vmatpush2.msra.mxu0 0.0
    %1021 = vmatprep.subr.mxu0 0.0
    %1022 = vmatpush2.msra.mxu0 0.0
    %1023 = vmatprep.subr.mxu0 0.0
    %1024 = vmatpush2.msra.mxu0 0.0
    %1025 = vmatprep.subr.mxu0 0.0
    %1026 = vmatpush2.msra.mxu0 0.0
    %1027 = vmatprep.subr.mxu0 0.0
    %1028 = vmatpush2.msra.mxu0 0.0
    %1029 = vmatprep.subr.mxu0 0.0
    %1030 = vmatpush2.msra.mxu0 0.0
    %1031 = vmatprep.subr.mxu0 0.0
    %1032 = vmatpush2.msra.mxu0 0.0
    %1033 = vmatprep.subr.mxu0 0.0
    %1034 = vmatpush2.msra.mxu0 0.0
    %1035 = vmatprep.subr.mxu0 0.0
    %1036 = vmatpush2.msra.mxu0 0.0
    %1037 = vmatprep.subr.mxu0 0.0
    %1038 = vmatpush2.msra.mxu0 0.0
    %1039 = vmatprep.subr.mxu0 0.0
    %1040 = vmatpush2.msra.mxu0 0.0
    %1041 = vmatprep.subr.mxu0 0.0
    %1042 = vmatpush2.msra.mxu0 0.0
    %1043 = vmatprep.subr.mxu0 0.0
    %1044 = vmatpush2.msra.mxu0 0.0
    %1045 = vmatprep.mubr.f32.mxu0 0.0
    %1046 = vmatmul.mubr.f32.gmra.mxu0 %v980
    %v1047 = vpop.f32.mrf.mxu0
    %v1048 = vadd.f32 0.0, %v1047
    %v1049 = vpop.f32.mrf.mxu0
    %v1050 = vadd.f32 0.0, %v1049
    %1051 = vdwg.mxu0
    %1052 = vmatprep.subr.mxu0 %v106
    %1053 = vmatpush1.msra.mxu0 %v105
    %1054 = vmatprep.subr.mxu0 %v102
    %1055 = vmatpush1.msra.mxu0 %v101
    %1056 = vmatprep.subr.mxu0 %v98
    %1057 = vmatpush1.msra.mxu0 %v97
    %1058 = vmatprep.subr.mxu0 %v94
    %1059 = vmatpush1.msra.mxu0 %v93
    %1060 = vmatprep.subr.mxu0 %v90
    %1061 = vmatpush1.msra.mxu0 %v89
    %1062 = vmatprep.subr.mxu0 %v86
    %1063 = vmatpush1.msra.mxu0 %v85
    %1064 = vmatprep.subr.mxu0 %v82
    %1065 = vmatpush1.msra.mxu0 %v81
    %1066 = vmatprep.subr.mxu0 %v78
    %1067 = vmatpush1.msra.mxu0 %v77
    %1068 = vmatprep.subr.mxu0 %v74
    %1069 = vmatpush1.msra.mxu0 %v73
    %1070 = vmatprep.subr.mxu0 %v70
    %1071 = vmatpush1.msra.mxu0 %v69
    %1072 = vmatprep.subr.mxu0 %v66
    %1073 = vmatpush1.msra.mxu0 %v65
    %1074 = vmatprep.subr.mxu0 %v62
    %1075 = vmatpush1.msra.mxu0 %v61
    %1076 = vmatprep.subr.mxu0 %v58
    %1077 = vmatpush1.msra.mxu0 %v57
    %1078 = vmatprep.subr.mxu0 %v54
    %1079 = vmatpush1.msra.mxu0 %v53
    %1080 = vmatprep.subr.mxu0 %v50
    %1081 = vmatpush1.msra.mxu0 %v49
    %1082 = vmatprep.subr.mxu0 %v46
    %1083 = vmatpush1.msra.mxu0 %v45
    %1084 = vmatprep.subr.mxu0 0.0
    %1085 = vmatpush2.msra.mxu0 0.0
    %1086 = vmatprep.subr.mxu0 0.0
    %1087 = vmatpush2.msra.mxu0 0.0
    %1088 = vmatprep.subr.mxu0 0.0
    %1089 = vmatpush2.msra.mxu0 0.0
    %1090 = vmatprep.subr.mxu0 0.0
    %1091 = vmatpush2.msra.mxu0 0.0
    %1092 = vmatprep.subr.mxu0 0.0
    %1093 = vmatpush2.msra.mxu0 0.0
    %1094 = vmatprep.subr.mxu0 0.0
    %1095 = vmatpush2.msra.mxu0 0.0
    %1096 = vmatprep.subr.mxu0 0.0
    %1097 = vmatpush2.msra.mxu0 0.0
    %1098 = vmatprep.subr.mxu0 0.0
    %1099 = vmatpush2.msra.mxu0 0.0
    %1100 = vmatprep.subr.mxu0 0.0
    %1101 = vmatpush2.msra.mxu0 0.0
    %1102 = vmatprep.subr.mxu0 0.0
    %1103 = vmatpush2.msra.mxu0 0.0
    %1104 = vmatprep.subr.mxu0 0.0
    %1105 = vmatpush2.msra.mxu0 0.0
    %1106 = vmatprep.subr.mxu0 0.0
    %1107 = vmatpush2.msra.mxu0 0.0
    %1108 = vmatprep.subr.mxu0 0.0
    %1109 = vmatpush2.msra.mxu0 0.0
    %1110 = vmatprep.subr.mxu0 0.0
    %1111 = vmatpush2.msra.mxu0 0.0
    %1112 = vmatprep.subr.mxu0 0.0
    %1113 = vmatpush2.msra.mxu0 0.0
    %1114 = vmatprep.subr.mxu0 0.0
    %1115 = vmatpush2.msra.mxu0 0.0
    %1116 = vmatprep.mubr.f32.mxu0 0.0
    %1117 = vmatmul.mubr.f32.gmra.mxu0 %v980
    %v1118 = vpop.f32.mrf.mxu0
    %v1119 = vadd.f32 0.0, %v1118
    %v1120 = vpop.f32.mrf.mxu0
    %v1121 = vadd.f32 0.0, %v1120
    %1122 = vdwg.mxu0
    %v1123 = vxor.u32 %v1048, 2147483648
    %v1124 = vxor.u32 %v1050, 2147483648
    %v1125 = vxor.u32 %v1119, 2147483648
    %v1126 = vmul.f32 %v1123, 1.442695
    %v1127 = vpow.pop %v1126
    %v1128 = vmul.f32 %v1124, 1.442695
    %v1129 = vpow.pop %v1128
    %v1130 = vmul.f32 %v1125, 1.442695
    %v1131 = vpow.pop %v1130
    %v1132 = vadd.f32 %v1127, 1.0
    %v1133 = vadd.f32 %v1129, 1.0
    %v1134 = vadd.f32 %v1131, 1.0
    %v1135 = vrcp.pop %v1132
    %v1136 = vmul.f32 1.0, %v1135
    %v1137 = vrcp.pop %v1133
    %v1138 = vmul.f32 1.0, %v1137
    %v1139 = vrcp.pop %v1134
    %v1140 = vmul.f32 1.0, %v1139
    %v1141 = vtanh.pop %v1121
    %v1142 = vmul.f32 %v1138, %v975
    %v1143 = vmul.f32 %v1136, %v1141
    %v1144 = vadd.f32 %v1142, %v1143
    %v1145 = vtanh.pop %v1144
    %v1146 = vmul.f32 %v1140, %v1145
    %v1147 = vsel %vm628, %v1146, %v456
    %v1148 = vsel %vm628, %v1144, %v457
    %s1149 = scalar_lea.vmem [#allocation7], 6
    %1150 = vst [vmem:[%s1149] sm:$0x3] %v1146
    %s1151 = scalar_lea.vmem [#allocation2], 12
    %v1152 = vld [vmem:[%s1151] sm:$0x3]
    %v1153 = vsel %vm111, %v1152, %v1147
    %1154 = vmatprep.subr.mxu0 %v104
    %1155 = vmatpush1.msra.mxu0 %v103
    %1156 = vmatprep.subr.mxu0 %v100
    %1157 = vmatpush1.msra.mxu0 %v99
    %1158 = vmatprep.subr.mxu0 %v96
    %1159 = vmatpush1.msra.mxu0 %v95
    %1160 = vmatprep.subr.mxu0 %v92
    %1161 = vmatpush1.msra.mxu0 %v91
    %1162 = vmatprep.subr.mxu0 %v88
    %1163 = vmatpush1.msra.mxu0 %v87
    %1164 = vmatprep.subr.mxu0 %v84
    %1165 = vmatpush1.msra.mxu0 %v83
    %1166 = vmatprep.subr.mxu0 %v80
    %1167 = vmatpush1.msra.mxu0 %v79
    %1168 = vmatprep.subr.mxu0 %v76
    %1169 = vmatpush1.msra.mxu0 %v75
    %1170 = vmatprep.subr.mxu0 %v72
    %1171 = vmatpush1.msra.mxu0 %v71
    %1172 = vmatprep.subr.mxu0 %v68
    %1173 = vmatpush1.msra.mxu0 %v67
    %1174 = vmatprep.subr.mxu0 %v64
    %1175 = vmatpush1.msra.mxu0 %v63
    %1176 = vmatprep.subr.mxu0 %v60
    %1177 = vmatpush1.msra.mxu0 %v59
    %1178 = vmatprep.subr.mxu0 %v56
    %1179 = vmatpush1.msra.mxu0 %v55
    %1180 = vmatprep.subr.mxu0 %v52
    %1181 = vmatpush1.msra.mxu0 %v51
    %1182 = vmatprep.subr.mxu0 %v48
    %1183 = vmatpush1.msra.mxu0 %v47
    %1184 = vmatprep.subr.mxu0 %v44
    %1185 = vmatpush1.msra.mxu0 %v43
    %1186 = vmatprep.subr.mxu0 0.0
    %1187 = vmatpush2.msra.mxu0 0.0
    %1188 = vmatprep.subr.mxu0 0.0
    %1189 = vmatpush2.msra.mxu0 0.0
    %1190 = vmatprep.subr.mxu0 0.0
    %1191 = vmatpush2.msra.mxu0 0.0
    %1192 = vmatprep.subr.mxu0 0.0
    %1193 = vmatpush2.msra.mxu0 0.0
    %1194 = vmatprep.subr.mxu0 0.0
    %1195 = vmatpush2.msra.mxu0 0.0
    %1196 = vmatprep.subr.mxu0 0.0
    %1197 = vmatpush2.msra.mxu0 0.0
    %1198 = vmatprep.subr.mxu0 0.0
    %1199 = vmatpush2.msra.mxu0 0.0
    %1200 = vmatprep.subr.mxu0 0.0
    %1201 = vmatpush2.msra.mxu0 0.0
    %1202 = vmatprep.subr.mxu0 0.0
    %1203 = vmatpush2.msra.mxu0 0.0
    %1204 = vmatprep.subr.mxu0 0.0
    %1205 = vmatpush2.msra.mxu0 0.0
    %1206 = vmatprep.subr.mxu0 0.0
    %1207 = vmatpush2.msra.mxu0 0.0
    %1208 = vmatprep.subr.mxu0 0.0
    %1209 = vmatpush2.msra.mxu0 0.0
    %1210 = vmatprep.subr.mxu0 0.0
    %1211 = vmatpush2.msra.mxu0 0.0
    %1212 = vmatprep.subr.mxu0 0.0
    %1213 = vmatpush2.msra.mxu0 0.0
    %1214 = vmatprep.subr.mxu0 0.0
    %1215 = vmatpush2.msra.mxu0 0.0
    %1216 = vmatprep.subr.mxu0 0.0
    %1217 = vmatpush2.msra.mxu0 0.0
    %1218 = vmatprep.mubr.f32.mxu0 0.0
    %1219 = vmatmul.mubr.f32.gmra.mxu0 %v1153
    %v1220 = vpop.f32.mrf.mxu0
    %v1221 = vadd.f32 0.0, %v1220
    %v1222 = vpop.f32.mrf.mxu0
    %v1223 = vadd.f32 0.0, %v1222
    %1224 = vdwg.mxu0
    %1225 = vmatprep.subr.mxu0 %v106
    %1226 = vmatpush1.msra.mxu0 %v105
    %1227 = vmatprep.subr.mxu0 %v102
    %1228 = vmatpush1.msra.mxu0 %v101
    %1229 = vmatprep.subr.mxu0 %v98
    %1230 = vmatpush1.msra.mxu0 %v97
    %1231 = vmatprep.subr.mxu0 %v94
    %1232 = vmatpush1.msra.mxu0 %v93
    %1233 = vmatprep.subr.mxu0 %v90
    %1234 = vmatpush1.msra.mxu0 %v89
    %1235 = vmatprep.subr.mxu0 %v86
    %1236 = vmatpush1.msra.mxu0 %v85
    %1237 = vmatprep.subr.mxu0 %v82
    %1238 = vmatpush1.msra.mxu0 %v81
    %1239 = vmatprep.subr.mxu0 %v78
    %1240 = vmatpush1.msra.mxu0 %v77
    %1241 = vmatprep.subr.mxu0 %v74
    %1242 = vmatpush1.msra.mxu0 %v73
    %1243 = vmatprep.subr.mxu0 %v70
    %1244 = vmatpush1.msra.mxu0 %v69
    %1245 = vmatprep.subr.mxu0 %v66
    %1246 = vmatpush1.msra.mxu0 %v65
    %1247 = vmatprep.subr.mxu0 %v62
    %1248 = vmatpush1.msra.mxu0 %v61
    %1249 = vmatprep.subr.mxu0 %v58
    %1250 = vmatpush1.msra.mxu0 %v57
    %1251 = vmatprep.subr.mxu0 %v54
    %1252 = vmatpush1.msra.mxu0 %v53
    %1253 = vmatprep.subr.mxu0 %v50
    %1254 = vmatpush1.msra.mxu0 %v49
    %1255 = vmatprep.subr.mxu0 %v46
    %1256 = vmatpush1.msra.mxu0 %v45
    %1257 = vmatprep.subr.mxu0 0.0
    %1258 = vmatpush2.msra.mxu0 0.0
    %1259 = vmatprep.subr.mxu0 0.0
    %1260 = vmatpush2.msra.mxu0 0.0
    %1261 = vmatprep.subr.mxu0 0.0
    %1262 = vmatpush2.msra.mxu0 0.0
    %1263 = vmatprep.subr.mxu0 0.0
    %1264 = vmatpush2.msra.mxu0 0.0
    %1265 = vmatprep.subr.mxu0 0.0
    %1266 = vmatpush2.msra.mxu0 0.0
    %1267 = vmatprep.subr.mxu0 0.0
    %1268 = vmatpush2.msra.mxu0 0.0
    %1269 = vmatprep.subr.mxu0 0.0
    %1270 = vmatpush2.msra.mxu0 0.0
    %1271 = vmatprep.subr.mxu0 0.0
    %1272 = vmatpush2.msra.mxu0 0.0
    %1273 = vmatprep.subr.mxu0 0.0
    %1274 = vmatpush2.msra.mxu0 0.0
    %1275 = vmatprep.subr.mxu0 0.0
    %1276 = vmatpush2.msra.mxu0 0.0
    %1277 = vmatprep.subr.mxu0 0.0
    %1278 = vmatpush2.msra.mxu0 0.0
    %1279 = vmatprep.subr.mxu0 0.0
    %1280 = vmatpush2.msra.mxu0 0.0
    %1281 = vmatprep.subr.mxu0 0.0
    %1282 = vmatpush2.msra.mxu0 0.0
    %1283 = vmatprep.subr.mxu0 0.0
    %1284 = vmatpush2.msra.mxu0 0.0
    %1285 = vmatprep.subr.mxu0 0.0
    %1286 = vmatpush2.msra.mxu0 0.0
    %1287 = vmatprep.subr.mxu0 0.0
    %1288 = vmatpush2.msra.mxu0 0.0
    %1289 = vmatprep.mubr.f32.mxu0 0.0
    %1290 = vmatmul.mubr.f32.gmra.mxu0 %v1153
    %v1291 = vpop.f32.mrf.mxu0
    %v1292 = vadd.f32 0.0, %v1291
    %v1293 = vpop.f32.mrf.mxu0
    %v1294 = vadd.f32 0.0, %v1293
    %1295 = vdwg.mxu0
    %v1296 = vxor.u32 %v1221, 2147483648
    %v1297 = vxor.u32 %v1223, 2147483648
    %v1298 = vxor.u32 %v1292, 2147483648
    %v1299 = vmul.f32 %v1296, 1.442695
    %v1300 = vpow.pop %v1299
    %v1301 = vmul.f32 %v1297, 1.442695
    %v1302 = vpow.pop %v1301
    %v1303 = vmul.f32 %v1298, 1.442695
    %v1304 = vpow.pop %v1303
    %v1305 = vadd.f32 %v1300, 1.0
    %v1306 = vadd.f32 %v1302, 1.0
    %v1307 = vadd.f32 %v1304, 1.0
    %v1308 = vrcp.pop %v1305
    %v1309 = vmul.f32 1.0, %v1308
    %v1310 = vrcp.pop %v1306
    %v1311 = vmul.f32 1.0, %v1310
    %v1312 = vrcp.pop %v1307
    %v1313 = vmul.f32 1.0, %v1312
    %v1314 = vtanh.pop %v1294
    %v1315 = vmul.f32 %v1311, %v1148
    %v1316 = vmul.f32 %v1309, %v1314
    %v1317 = vadd.f32 %v1315, %v1316
    %v1318 = vtanh.pop %v1317
    %v1319 = vmul.f32 %v1313, %v1318
    %v1320 = vsel %vm628, %v1319, %v456
    %v1321 = vsel %vm628, %v1317, %v457
    %s1322 = scalar_lea.vmem [#allocation7], 8
    %1323 = vst [vmem:[%s1322] sm:$0x3] %v1319
    %s1324 = scalar_lea.vmem [#allocation2], 14
    %v1325 = vld [vmem:[%s1324] sm:$0x3]
    %v1326 = vsel %vm111, %v1325, %v1320
    %1327 = vmatprep.subr.mxu0 %v104
    %1328 = vmatpush1.msra.mxu0 %v103
    %1329 = vmatprep.subr.mxu0 %v100
    %1330 = vmatpush1.msra.mxu0 %v99
    %1331 = vmatprep.subr.mxu0 %v96
    %1332 = vmatpush1.msra.mxu0 %v95
    %1333 = vmatprep.subr.mxu0 %v92
    %1334 = vmatpush1.msra.mxu0 %v91
    %1335 = vmatprep.subr.mxu0 %v88
    %1336 = vmatpush1.msra.mxu0 %v87
    %1337 = vmatprep.subr.mxu0 %v84
    %1338 = vmatpush1.msra.mxu0 %v83
    %1339 = vmatprep.subr.mxu0 %v80
    %1340 = vmatpush1.msra.mxu0 %v79
    %1341 = vmatprep.subr.mxu0 %v76
    %1342 = vmatpush1.msra.mxu0 %v75
    %1343 = vmatprep.subr.mxu0 %v72
    %1344 = vmatpush1.msra.mxu0 %v71
    %1345 = vmatprep.subr.mxu0 %v68
    %1346 = vmatpush1.msra.mxu0 %v67
    %1347 = vmatprep.subr.mxu0 %v64
    %1348 = vmatpush1.msra.mxu0 %v63
    %1349 = vmatprep.subr.mxu0 %v60
    %1350 = vmatpush1.msra.mxu0 %v59
    %1351 = vmatprep.subr.mxu0 %v56
    %1352 = vmatpush1.msra.mxu0 %v55
    %1353 = vmatprep.subr.mxu0 %v52
    %1354 = vmatpush1.msra.mxu0 %v51
    %1355 = vmatprep.subr.mxu0 %v48
    %1356 = vmatpush1.msra.mxu0 %v47
    %1357 = vmatprep.subr.mxu0 %v44
    %1358 = vmatpush1.msra.mxu0 %v43
    %1359 = vmatprep.subr.mxu0 0.0
    %1360 = vmatpush2.msra.mxu0 0.0
    %1361 = vmatprep.subr.mxu0 0.0
    %1362 = vmatpush2.msra.mxu0 0.0
    %1363 = vmatprep.subr.mxu0 0.0
    %1364 = vmatpush2.msra.mxu0 0.0
    %1365 = vmatprep.subr.mxu0 0.0
    %1366 = vmatpush2.msra.mxu0 0.0
    %1367 = vmatprep.subr.mxu0 0.0
    %1368 = vmatpush2.msra.mxu0 0.0
    %1369 = vmatprep.subr.mxu0 0.0
    %1370 = vmatpush2.msra.mxu0 0.0
    %1371 = vmatprep.subr.mxu0 0.0
    %1372 = vmatpush2.msra.mxu0 0.0
    %1373 = vmatprep.subr.mxu0 0.0
    %1374 = vmatpush2.msra.mxu0 0.0
    %1375 = vmatprep.subr.mxu0 0.0
    %1376 = vmatpush2.msra.mxu0 0.0
    %1377 = vmatprep.subr.mxu0 0.0
    %1378 = vmatpush2.msra.mxu0 0.0
    %1379 = vmatprep.subr.mxu0 0.0
    %1380 = vmatpush2.msra.mxu0 0.0
    %1381 = vmatprep.subr.mxu0 0.0
    %1382 = vmatpush2.msra.mxu0 0.0
    %1383 = vmatprep.subr.mxu0 0.0
    %1384 = vmatpush2.msra.mxu0 0.0
    %1385 = vmatprep.subr.mxu0 0.0
    %1386 = vmatpush2.msra.mxu0 0.0
    %1387 = vmatprep.subr.mxu0 0.0
    %1388 = vmatpush2.msra.mxu0 0.0
    %1389 = vmatprep.subr.mxu0 0.0
    %1390 = vmatpush2.msra.mxu0 0.0
    %1391 = vmatprep.mubr.f32.mxu0 0.0
    %1392 = vmatmul.mubr.f32.gmra.mxu0 %v1326
    %v1393 = vpop.f32.mrf.mxu0
    %v1394 = vadd.f32 0.0, %v1393
    %v1395 = vpop.f32.mrf.mxu0
    %v1396 = vadd.f32 0.0, %v1395
    %1397 = vdwg.mxu0
    %1398 = vmatprep.subr.mxu0 %v106
    %1399 = vmatpush1.msra.mxu0 %v105
    %1400 = vmatprep.subr.mxu0 %v102
    %1401 = vmatpush1.msra.mxu0 %v101
    %1402 = vmatprep.subr.mxu0 %v98
    %1403 = vmatpush1.msra.mxu0 %v97
    %1404 = vmatprep.subr.mxu0 %v94
    %1405 = vmatpush1.msra.mxu0 %v93
    %1406 = vmatprep.subr.mxu0 %v90
    %1407 = vmatpush1.msra.mxu0 %v89
    %1408 = vmatprep.subr.mxu0 %v86
    %1409 = vmatpush1.msra.mxu0 %v85
    %1410 = vmatprep.subr.mxu0 %v82
    %1411 = vmatpush1.msra.mxu0 %v81
    %1412 = vmatprep.subr.mxu0 %v78
    %1413 = vmatpush1.msra.mxu0 %v77
    %1414 = vmatprep.subr.mxu0 %v74
    %1415 = vmatpush1.msra.mxu0 %v73
    %1416 = vmatprep.subr.mxu0 %v70
    %1417 = vmatpush1.msra.mxu0 %v69
    %1418 = vmatprep.subr.mxu0 %v66
    %1419 = vmatpush1.msra.mxu0 %v65
    %1420 = vmatprep.subr.mxu0 %v62
    %1421 = vmatpush1.msra.mxu0 %v61
    %1422 = vmatprep.subr.mxu0 %v58
    %1423 = vmatpush1.msra.mxu0 %v57
    %1424 = vmatprep.subr.mxu0 %v54
    %1425 = vmatpush1.msra.mxu0 %v53
    %1426 = vmatprep.subr.mxu0 %v50
    %1427 = vmatpush1.msra.mxu0 %v49
    %1428 = vmatprep.subr.mxu0 %v46
    %1429 = vmatpush1.msra.mxu0 %v45
    %1430 = vmatprep.subr.mxu0 0.0
    %1431 = vmatpush2.msra.mxu0 0.0
    %1432 = vmatprep.subr.mxu0 0.0
    %1433 = vmatpush2.msra.mxu0 0.0
    %1434 = vmatprep.subr.mxu0 0.0
    %1435 = vmatpush2.msra.mxu0 0.0
    %1436 = vmatprep.subr.mxu0 0.0
    %1437 = vmatpush2.msra.mxu0 0.0
    %1438 = vmatprep.subr.mxu0 0.0
    %1439 = vmatpush2.msra.mxu0 0.0
    %1440 = vmatprep.subr.mxu0 0.0
    %1441 = vmatpush2.msra.mxu0 0.0
    %1442 = vmatprep.subr.mxu0 0.0
    %1443 = vmatpush2.msra.mxu0 0.0
    %1444 = vmatprep.subr.mxu0 0.0
    %1445 = vmatpush2.msra.mxu0 0.0
    %1446 = vmatprep.subr.mxu0 0.0
    %1447 = vmatpush2.msra.mxu0 0.0
    %1448 = vmatprep.subr.mxu0 0.0
    %1449 = vmatpush2.msra.mxu0 0.0
    %1450 = vmatprep.subr.mxu0 0.0
    %1451 = vmatpush2.msra.mxu0 0.0
    %1452 = vmatprep.subr.mxu0 0.0
    %1453 = vmatpush2.msra.mxu0 0.0
    %1454 = vmatprep.subr.mxu0 0.0
    %1455 = vmatpush2.msra.mxu0 0.0
    %1456 = vmatprep.subr.mxu0 0.0
    %1457 = vmatpush2.msra.mxu0 0.0
    %1458 = vmatprep.subr.mxu0 0.0
    %1459 = vmatpush2.msra.mxu0 0.0
    %1460 = vmatprep.subr.mxu0 0.0
    %1461 = vmatpush2.msra.mxu0 0.0
    %1462 = vmatprep.mubr.f32.mxu0 0.0
    %1463 = vmatmul.mubr.f32.gmra.mxu0 %v1326
    %v1464 = vpop.f32.mrf.mxu0
    %v1465 = vadd.f32 0.0, %v1464
    %v1466 = vpop.f32.mrf.mxu0
    %v1467 = vadd.f32 0.0, %v1466
    %1468 = vdwg.mxu0
    %v1469 = vxor.u32 %v1394, 2147483648
    %v1470 = vxor.u32 %v1396, 2147483648
    %v1471 = vxor.u32 %v1465, 2147483648
    %v1472 = vmul.f32 %v1469, 1.442695
    %v1473 = vpow.pop %v1472
    %v1474 = vmul.f32 %v1470, 1.442695
    %v1475 = vpow.pop %v1474
    %v1476 = vmul.f32 %v1471, 1.442695
    %v1477 = vpow.pop %v1476
    %v1478 = vadd.f32 %v1473, 1.0
    %v1479 = vadd.f32 %v1475, 1.0
    %v1480 = vadd.f32 %v1477, 1.0
    %v1481 = vrcp.pop %v1478
    %v1482 = vmul.f32 1.0, %v1481
    %v1483 = vrcp.pop %v1479
    %v1484 = vmul.f32 1.0, %v1483
    %v1485 = vrcp.pop %v1480
    %v1486 = vmul.f32 1.0, %v1485
    %v1487 = vtanh.pop %v1467
    %v1488 = vmul.f32 %v1484, %v1321
    %v1489 = vmul.f32 %v1482, %v1487
    %v1490 = vadd.f32 %v1488, %v1489
    %v1491 = vtanh.pop %v1490
    %v1492 = vmul.f32 %v1486, %v1491
    %v1493 = vsel %vm628, %v1492, %v456
    %v1494 = vsel %vm628, %v1490, %v457
    %s1495 = scalar_lea.vmem [#allocation7], 10
    %1496 = vst [vmem:[%s1495] sm:$0x3] %v1492
    %s1497 = scalar_lea.vmem [#allocation2], 16
    %v1498 = vld [vmem:[%s1497] sm:$0x3]
    %v1499 = vsel %vm111, %v1498, %v1493
    %1500 = vmatprep.subr.mxu0 %v104
    %1501 = vmatpush1.msra.mxu0 %v103
    %1502 = vmatprep.subr.mxu0 %v100
    %1503 = vmatpush1.msra.mxu0 %v99
    %1504 = vmatprep.subr.mxu0 %v96
    %1505 = vmatpush1.msra.mxu0 %v95
    %1506 = vmatprep.subr.mxu0 %v92
    %1507 = vmatpush1.msra.mxu0 %v91
    %1508 = vmatprep.subr.mxu0 %v88
    %1509 = vmatpush1.msra.mxu0 %v87
    %1510 = vmatprep.subr.mxu0 %v84
    %1511 = vmatpush1.msra.mxu0 %v83
    %1512 = vmatprep.subr.mxu0 %v80
    %1513 = vmatpush1.msra.mxu0 %v79
    %1514 = vmatprep.subr.mxu0 %v76
    %1515 = vmatpush1.msra.mxu0 %v75
    %1516 = vmatprep.subr.mxu0 %v72
    %1517 = vmatpush1.msra.mxu0 %v71
    %1518 = vmatprep.subr.mxu0 %v68
    %1519 = vmatpush1.msra.mxu0 %v67
    %1520 = vmatprep.subr.mxu0 %v64
    %1521 = vmatpush1.msra.mxu0 %v63
    %1522 = vmatprep.subr.mxu0 %v60
    %1523 = vmatpush1.msra.mxu0 %v59
    %1524 = vmatprep.subr.mxu0 %v56
    %1525 = vmatpush1.msra.mxu0 %v55
    %1526 = vmatprep.subr.mxu0 %v52
    %1527 = vmatpush1.msra.mxu0 %v51
    %1528 = vmatprep.subr.mxu0 %v48
    %1529 = vmatpush1.msra.mxu0 %v47
    %1530 = vmatprep.subr.mxu0 %v44
    %1531 = vmatpush1.msra.mxu0 %v43
    %1532 = vmatprep.subr.mxu0 0.0
    %1533 = vmatpush2.msra.mxu0 0.0
    %1534 = vmatprep.subr.mxu0 0.0
    %1535 = vmatpush2.msra.mxu0 0.0
    %1536 = vmatprep.subr.mxu0 0.0
    %1537 = vmatpush2.msra.mxu0 0.0
    %1538 = vmatprep.subr.mxu0 0.0
    %1539 = vmatpush2.msra.mxu0 0.0
    %1540 = vmatprep.subr.mxu0 0.0
    %1541 = vmatpush2.msra.mxu0 0.0
    %1542 = vmatprep.subr.mxu0 0.0
    %1543 = vmatpush2.msra.mxu0 0.0
    %1544 = vmatprep.subr.mxu0 0.0
    %1545 = vmatpush2.msra.mxu0 0.0
    %1546 = vmatprep.subr.mxu0 0.0
    %1547 = vmatpush2.msra.mxu0 0.0
    %1548 = vmatprep.subr.mxu0 0.0
    %1549 = vmatpush2.msra.mxu0 0.0
    %1550 = vmatprep.subr.mxu0 0.0
    %1551 = vmatpush2.msra.mxu0 0.0
    %1552 = vmatprep.subr.mxu0 0.0
    %1553 = vmatpush2.msra.mxu0 0.0
    %1554 = vmatprep.subr.mxu0 0.0
    %1555 = vmatpush2.msra.mxu0 0.0
    %1556 = vmatprep.subr.mxu0 0.0
    %1557 = vmatpush2.msra.mxu0 0.0
    %1558 = vmatprep.subr.mxu0 0.0
    %1559 = vmatpush2.msra.mxu0 0.0
    %1560 = vmatprep.subr.mxu0 0.0
    %1561 = vmatpush2.msra.mxu0 0.0
    %1562 = vmatprep.subr.mxu0 0.0
    %1563 = vmatpush2.msra.mxu0 0.0
    %1564 = vmatprep.mubr.f32.mxu0 0.0
    %1565 = vmatmul.mubr.f32.gmra.mxu0 %v1499
    %v1566 = vpop.f32.mrf.mxu0
    %v1567 = vadd.f32 0.0, %v1566
    %v1568 = vpop.f32.mrf.mxu0
    %v1569 = vadd.f32 0.0, %v1568
    %1570 = vdwg.mxu0
    %1571 = vmatprep.subr.mxu0 %v106
    %1572 = vmatpush1.msra.mxu0 %v105
    %1573 = vmatprep.subr.mxu0 %v102
    %1574 = vmatpush1.msra.mxu0 %v101
    %1575 = vmatprep.subr.mxu0 %v98
    %1576 = vmatpush1.msra.mxu0 %v97
    %1577 = vmatprep.subr.mxu0 %v94
    %1578 = vmatpush1.msra.mxu0 %v93
    %1579 = vmatprep.subr.mxu0 %v90
    %1580 = vmatpush1.msra.mxu0 %v89
    %1581 = vmatprep.subr.mxu0 %v86
    %1582 = vmatpush1.msra.mxu0 %v85
    %1583 = vmatprep.subr.mxu0 %v82
    %1584 = vmatpush1.msra.mxu0 %v81
    %1585 = vmatprep.subr.mxu0 %v78
    %1586 = vmatpush1.msra.mxu0 %v77
    %1587 = vmatprep.subr.mxu0 %v74
    %1588 = vmatpush1.msra.mxu0 %v73
    %1589 = vmatprep.subr.mxu0 %v70
    %1590 = vmatpush1.msra.mxu0 %v69
    %1591 = vmatprep.subr.mxu0 %v66
    %1592 = vmatpush1.msra.mxu0 %v65
    %1593 = vmatprep.subr.mxu0 %v62
    %1594 = vmatpush1.msra.mxu0 %v61
    %1595 = vmatprep.subr.mxu0 %v58
    %1596 = vmatpush1.msra.mxu0 %v57
    %1597 = vmatprep.subr.mxu0 %v54
    %1598 = vmatpush1.msra.mxu0 %v53
    %1599 = vmatprep.subr.mxu0 %v50
    %1600 = vmatpush1.msra.mxu0 %v49
    %1601 = vmatprep.subr.mxu0 %v46
    %1602 = vmatpush1.msra.mxu0 %v45
    %1603 = vmatprep.subr.mxu0 0.0
    %1604 = vmatpush2.msra.mxu0 0.0
    %1605 = vmatprep.subr.mxu0 0.0
    %1606 = vmatpush2.msra.mxu0 0.0
    %1607 = vmatprep.subr.mxu0 0.0
    %1608 = vmatpush2.msra.mxu0 0.0
    %1609 = vmatprep.subr.mxu0 0.0
    %1610 = vmatpush2.msra.mxu0 0.0
    %1611 = vmatprep.subr.mxu0 0.0
    %1612 = vmatpush2.msra.mxu0 0.0
    %1613 = vmatprep.subr.mxu0 0.0
    %1614 = vmatpush2.msra.mxu0 0.0
    %1615 = vmatprep.subr.mxu0 0.0
    %1616 = vmatpush2.msra.mxu0 0.0
    %1617 = vmatprep.subr.mxu0 0.0
    %1618 = vmatpush2.msra.mxu0 0.0
    %1619 = vmatprep.subr.mxu0 0.0
    %1620 = vmatpush2.msra.mxu0 0.0
    %1621 = vmatprep.subr.mxu0 0.0
    %1622 = vmatpush2.msra.mxu0 0.0
    %1623 = vmatprep.subr.mxu0 0.0
    %1624 = vmatpush2.msra.mxu0 0.0
    %1625 = vmatprep.subr.mxu0 0.0
    %1626 = vmatpush2.msra.mxu0 0.0
    %1627 = vmatprep.subr.mxu0 0.0
    %1628 = vmatpush2.msra.mxu0 0.0
    %1629 = vmatprep.subr.mxu0 0.0
    %1630 = vmatpush2.msra.mxu0 0.0
    %1631 = vmatprep.subr.mxu0 0.0
    %1632 = vmatpush2.msra.mxu0 0.0
    %1633 = vmatprep.subr.mxu0 0.0
    %1634 = vmatpush2.msra.mxu0 0.0
    %1635 = vmatprep.mubr.f32.mxu0 0.0
    %1636 = vmatmul.mubr.f32.gmra.mxu0 %v1499
    %v1637 = vpop.f32.mrf.mxu0
    %v1638 = vadd.f32 0.0, %v1637
    %v1639 = vpop.f32.mrf.mxu0
    %v1640 = vadd.f32 0.0, %v1639
    %1641 = vdwg.mxu0
    %v1642 = vxor.u32 %v1567, 2147483648
    %v1643 = vxor.u32 %v1569, 2147483648
    %v1644 = vxor.u32 %v1638, 2147483648
    %v1645 = vmul.f32 %v1642, 1.442695
    %v1646 = vpow.pop %v1645
    %v1647 = vmul.f32 %v1643, 1.442695
    %v1648 = vpow.pop %v1647
    %v1649 = vmul.f32 %v1644, 1.442695
    %v1650 = vpow.pop %v1649
    %v1651 = vadd.f32 %v1646, 1.0
    %v1652 = vadd.f32 %v1648, 1.0
    %v1653 = vadd.f32 %v1650, 1.0
    %v1654 = vrcp.pop %v1651
    %v1655 = vmul.f32 1.0, %v1654
    %v1656 = vrcp.pop %v1652
    %v1657 = vmul.f32 1.0, %v1656
    %v1658 = vrcp.pop %v1653
    %v1659 = vmul.f32 1.0, %v1658
    %v1660 = vtanh.pop %v1640
    %v1661 = vmul.f32 %v1657, %v1494
    %v1662 = vmul.f32 %v1655, %v1660
    %v1663 = vadd.f32 %v1661, %v1662
    %v1664 = vtanh.pop %v1663
    %v1665 = vmul.f32 %v1659, %v1664
    %vm1666 = vcmp.ge.s32.totalorder %v108, 15
    %vm1667 = vmand %vm1666, %vm627
    %v1668 = vsel %vm1667, %v1665, %v1493
    %v1669 = vsel %vm1667, %v1663, %v1494
    %s1670 = scalar_lea.vmem [#allocation7], 12
    %1671 = vst [vmem:[%s1670] sm:$0x3] %v1665
    %s1672 = scalar_lea.vmem [#allocation2], 18
    %v1673 = vld [vmem:[%s1672] sm:$0x3]
    %v1674 = vsel %vm111, %v1673, %v1668
    %1675 = vmatprep.subr.mxu0 %v104
    %1676 = vmatpush1.msra.mxu0 %v103
    %1677 = vmatprep.subr.mxu0 %v100
    %1678 = vmatpush1.msra.mxu0 %v99
    %1679 = vmatprep.subr.mxu0 %v96
    %1680 = vmatpush1.msra.mxu0 %v95
    %1681 = vmatprep.subr.mxu0 %v92
    %1682 = vmatpush1.msra.mxu0 %v91
    %1683 = vmatprep.subr.mxu0 %v88
    %1684 = vmatpush1.msra.mxu0 %v87
    %1685 = vmatprep.subr.mxu0 %v84
    %1686 = vmatpush1.msra.mxu0 %v83
    %1687 = vmatprep.subr.mxu0 %v80
    %1688 = vmatpush1.msra.mxu0 %v79
    %1689 = vmatprep.subr.mxu0 %v76
    %1690 = vmatpush1.msra.mxu0 %v75
    %1691 = vmatprep.subr.mxu0 %v72
    %1692 = vmatpush1.msra.mxu0 %v71
    %1693 = vmatprep.subr.mxu0 %v68
    %1694 = vmatpush1.msra.mxu0 %v67
    %1695 = vmatprep.subr.mxu0 %v64
    %1696 = vmatpush1.msra.mxu0 %v63
    %1697 = vmatprep.subr.mxu0 %v60
    %1698 = vmatpush1.msra.mxu0 %v59
    %1699 = vmatprep.subr.mxu0 %v56
    %1700 = vmatpush1.msra.mxu0 %v55
    %1701 = vmatprep.subr.mxu0 %v52
    %1702 = vmatpush1.msra.mxu0 %v51
    %1703 = vmatprep.subr.mxu0 %v48
    %1704 = vmatpush1.msra.mxu0 %v47
    %1705 = vmatprep.subr.mxu0 %v44
    %1706 = vmatpush1.msra.mxu0 %v43
    %1707 = vmatprep.subr.mxu0 0.0
    %1708 = vmatpush2.msra.mxu0 0.0
    %1709 = vmatprep.subr.mxu0 0.0
    %1710 = vmatpush2.msra.mxu0 0.0
    %1711 = vmatprep.subr.mxu0 0.0
    %1712 = vmatpush2.msra.mxu0 0.0
    %1713 = vmatprep.subr.mxu0 0.0
    %1714 = vmatpush2.msra.mxu0 0.0
    %1715 = vmatprep.subr.mxu0 0.0
    %1716 = vmatpush2.msra.mxu0 0.0
    %1717 = vmatprep.subr.mxu0 0.0
    %1718 = vmatpush2.msra.mxu0 0.0
    %1719 = vmatprep.subr.mxu0 0.0
    %1720 = vmatpush2.msra.mxu0 0.0
    %1721 = vmatprep.subr.mxu0 0.0
    %1722 = vmatpush2.msra.mxu0 0.0
    %1723 = vmatprep.subr.mxu0 0.0
    %1724 = vmatpush2.msra.mxu0 0.0
    %1725 = vmatprep.subr.mxu0 0.0
    %1726 = vmatpush2.msra.mxu0 0.0
    %1727 = vmatprep.subr.mxu0 0.0
    %1728 = vmatpush2.msra.mxu0 0.0
    %1729 = vmatprep.subr.mxu0 0.0
    %1730 = vmatpush2.msra.mxu0 0.0
    %1731 = vmatprep.subr.mxu0 0.0
    %1732 = vmatpush2.msra.mxu0 0.0
    %1733 = vmatprep.subr.mxu0 0.0
    %1734 = vmatpush2.msra.mxu0 0.0
    %1735 = vmatprep.subr.mxu0 0.0
    %1736 = vmatpush2.msra.mxu0 0.0
    %1737 = vmatprep.subr.mxu0 0.0
    %1738 = vmatpush2.msra.mxu0 0.0
    %1739 = vmatprep.mubr.f32.mxu0 0.0
    %1740 = vmatmul.mubr.f32.gmra.mxu0 %v1674
    %v1741 = vpop.f32.mrf.mxu0
    %v1742 = vadd.f32 0.0, %v1741
    %v1743 = vpop.f32.mrf.mxu0
    %v1744 = vadd.f32 0.0, %v1743
    %1745 = vdwg.mxu0
    %1746 = vmatprep.subr.mxu0 %v106
    %1747 = vmatpush1.msra.mxu0 %v105
    %1748 = vmatprep.subr.mxu0 %v102
    %1749 = vmatpush1.msra.mxu0 %v101
    %1750 = vmatprep.subr.mxu0 %v98
    %1751 = vmatpush1.msra.mxu0 %v97
    %1752 = vmatprep.subr.mxu0 %v94
    %1753 = vmatpush1.msra.mxu0 %v93
    %1754 = vmatprep.subr.mxu0 %v90
    %1755 = vmatpush1.msra.mxu0 %v89
    %1756 = vmatprep.subr.mxu0 %v86
    %1757 = vmatpush1.msra.mxu0 %v85
    %1758 = vmatprep.subr.mxu0 %v82
    %1759 = vmatpush1.msra.mxu0 %v81
    %1760 = vmatprep.subr.mxu0 %v78
    %1761 = vmatpush1.msra.mxu0 %v77
    %1762 = vmatprep.subr.mxu0 %v74
    %1763 = vmatpush1.msra.mxu0 %v73
    %1764 = vmatprep.subr.mxu0 %v70
    %1765 = vmatpush1.msra.mxu0 %v69
    %1766 = vmatprep.subr.mxu0 %v66
    %1767 = vmatpush1.msra.mxu0 %v65
    %1768 = vmatprep.subr.mxu0 %v62
    %1769 = vmatpush1.msra.mxu0 %v61
    %1770 = vmatprep.subr.mxu0 %v58
    %1771 = vmatpush1.msra.mxu0 %v57
    %1772 = vmatprep.subr.mxu0 %v54
    %1773 = vmatpush1.msra.mxu0 %v53
    %1774 = vmatprep.subr.mxu0 %v50
    %1775 = vmatpush1.msra.mxu0 %v49
    %1776 = vmatprep.subr.mxu0 %v46
    %1777 = vmatpush1.msra.mxu0 %v45
    %1778 = vmatprep.subr.mxu0 0.0
    %1779 = vmatpush2.msra.mxu0 0.0
    %1780 = vmatprep.subr.mxu0 0.0
    %1781 = vmatpush2.msra.mxu0 0.0
    %1782 = vmatprep.subr.mxu0 0.0
    %1783 = vmatpush2.msra.mxu0 0.0
    %1784 = vmatprep.subr.mxu0 0.0
    %1785 = vmatpush2.msra.mxu0 0.0
    %1786 = vmatprep.subr.mxu0 0.0
    %1787 = vmatpush2.msra.mxu0 0.0
    %1788 = vmatprep.subr.mxu0 0.0
    %1789 = vmatpush2.msra.mxu0 0.0
    %1790 = vmatprep.subr.mxu0 0.0
    %1791 = vmatpush2.msra.mxu0 0.0
    %1792 = vmatprep.subr.mxu0 0.0
    %1793 = vmatpush2.msra.mxu0 0.0
    %1794 = vmatprep.subr.mxu0 0.0
    %1795 = vmatpush2.msra.mxu0 0.0
    %1796 = vmatprep.subr.mxu0 0.0
    %1797 = vmatpush2.msra.mxu0 0.0
    %1798 = vmatprep.subr.mxu0 0.0
    %1799 = vmatpush2.msra.mxu0 0.0
    %1800 = vmatprep.subr.mxu0 0.0
    %1801 = vmatpush2.msra.mxu0 0.0
    %1802 = vmatprep.subr.mxu0 0.0
    %1803 = vmatpush2.msra.mxu0 0.0
    %1804 = vmatprep.subr.mxu0 0.0
    %1805 = vmatpush2.msra.mxu0 0.0
    %1806 = vmatprep.subr.mxu0 0.0
    %1807 = vmatpush2.msra.mxu0 0.0
    %1808 = vmatprep.subr.mxu0 0.0
    %1809 = vmatpush2.msra.mxu0 0.0
    %1810 = vmatprep.mubr.f32.mxu0 0.0
    %1811 = vmatmul.mubr.f32.gmra.mxu0 %v1674
    %v1812 = vpop.f32.mrf.mxu0
    %v1813 = vadd.f32 0.0, %v1812
    %v1814 = vpop.f32.mrf.mxu0
    %v1815 = vadd.f32 0.0, %v1814
    %1816 = vdwg.mxu0
    %v1817 = vxor.u32 %v1742, 2147483648
    %v1818 = vxor.u32 %v1744, 2147483648
    %v1819 = vxor.u32 %v1813, 2147483648
    %v1820 = vmul.f32 %v1817, 1.442695
    %v1821 = vpow.pop %v1820
    %v1822 = vmul.f32 %v1818, 1.442695
    %v1823 = vpow.pop %v1822
    %v1824 = vmul.f32 %v1819, 1.442695
    %v1825 = vpow.pop %v1824
    %v1826 = vadd.f32 %v1821, 1.0
    %v1827 = vadd.f32 %v1823, 1.0
    %v1828 = vadd.f32 %v1825, 1.0
    %v1829 = vrcp.pop %v1826
    %v1830 = vmul.f32 1.0, %v1829
    %v1831 = vrcp.pop %v1827
    %v1832 = vmul.f32 1.0, %v1831
    %v1833 = vrcp.pop %v1828
    %v1834 = vmul.f32 1.0, %v1833
    %v1835 = vtanh.pop %v1815
    %v1836 = vmul.f32 %v1832, %v1669
    %v1837 = vmul.f32 %v1830, %v1835
    %v1838 = vadd.f32 %v1836, %v1837
    %v1839 = vtanh.pop %v1838
    %v1840 = vmul.f32 %v1834, %v1839
    %vm1841 = vcmp.ge.s32.totalorder %v108, 25
    %vm1842 = vmand %vm1841, %vm627
    %v1843 = vsel %vm1842, %v1840, %v1668
    %s1844 = scalar_lea.vmem [#allocation7], 14
    %1845 = vst [vmem:[%s1844] sm:$0x3] %v1840
    %1846 = vst [vmem:[#allocation8] sm:$0x3] %v1843
    // Predicated region
    $region18: #{tpu_custom_call.1} parent=1 // pred_check
      _
    $region19: #{tpu_custom_call.1} parent=1 // pred_check_branch
      %1848 = sbr.rel (0) target = $region21
    $region20: #{tpu_custom_call.1} parent=1 // pred_region
      %s1850 = ssub.s32 256, 256
      %1851 = vsyncadd [#allocation4], %s1850
      %s1852 = sshll.u32 [#allocation7], 4
      %s1853 = int_to_ptr.vmem [resolvable:$true] %s1852
      %1858 = dma.vmem_to_hbm [thread:$0]  %s1853, 256, %s2, [#allocation4], 32, 32, 2
    $region21: #{tpu_custom_call.1} parent=1 // pred_fallthru
      _
    // Predicated region
    $region22: #{tpu_custom_call.1} parent=1 // pred_check
      _
    $region23: #{tpu_custom_call.1} parent=1 // pred_check_branch
      %1860 = sbr.rel (0) target = $region25
    $region24: #{tpu_custom_call.1} parent=1 // pred_region
      %s1862 = ssub.s32 32, 32
      %1863 = vsyncadd [#allocation9], %s1862
      %s1865 = sshll.u32 [#allocation8], 4
      %s1866 = int_to_ptr.vmem [resolvable:$true] %s1865
      %1868 = dma.vmem_to_hbm [thread:$0]  %s1866, 32, %s3, [#allocation9]
    $region25: #{tpu_custom_call.1} parent=1 // pred_fallthru
      _
    // Predicated region
    $region26: #{tpu_custom_call.1} parent=1 // pred_check
      _
    $region27: #{tpu_custom_call.1} parent=1 // pred_check_branch
      %1870 = sbr.rel (0) target = $region29
    $region28: #{tpu_custom_call.1} parent=1 // pred_region
      %1871 = dma.done [#allocation4], 256
    $region29: #{tpu_custom_call.1} parent=1 // pred_fallthru
      _
    // Predicated region
    $region30: #{tpu_custom_call.1} parent=1 // pred_check
      _
    $region31: #{tpu_custom_call.1} parent=1 // pred_check_branch
      %1873 = sbr.rel (0) target = $region33
    $region32: #{tpu_custom_call.1} parent=1 // pred_region
      %1874 = dma.done [#allocation9], 32
    $region33: #{tpu_custom_call.1} parent=1 // pred_fallthru
      _
    %1875 = vsyncpa [#allocation3], 1
    %1876 = vsyncpa [#allocation6], 1
    %1877 = vsyncpa [#allocation4], 1
    %1878 = vsyncpa [#allocation9], 1

</llo_original>
